<compile_context>
chip_gen: v6e
topology: v6e:2x2x1
jax: 0.10.0
libtpu: 0.0.40
codegen_flags: <defaults>
</compile_context>

<pallas_src>
import functools

import jax
import jax.numpy as jnp
from jax import lax
from jax.experimental import pallas as pl
from jax.experimental.pallas import tpu as pltpu

IN_CHANNELS = 8
BN_EPS = 1e-5

# (cin, cout, kernel, padding, stride) — matches nn.Sequential in __init__
CONV_CFG = [
    (IN_CHANNELS, 32, 5, 2, 1),
    (32, 64, 3, 1, 2),
    (64, 128, 3, 1, 2),
    (128, 256, 3, 1, 1),
]


def _softplus(x):
    # PyTorch nn.Softplus(beta=1, threshold=20)
    return jnp.where(x > 20.0, x, jnp.log1p(jnp.exp(jnp.minimum(x, 20.0))))


def cnn_kernel(x_ref,
               w1p_ref, w1c_ref, w1n_ref, s1_ref, b1_ref,
               w2p_ref, w2m_ref, s2_ref, b2_ref,
               w3p_ref, w3m_ref, s3_ref, b3_ref,
               w4p_ref, w4m_ref, w4n_ref, s4_ref, b4_ref,
               wl1a_ref, wl1m_ref, sl1_ref, bl1_ref,
               wl2_ref, bl2_ref,
               out_ref, *, batch, nblk):
    rows = batch * nblk                                      # B * L/4 (sublane-aligned)
    bf16 = jnp.bfloat16
    f32 = jnp.float32

    # Hoisted row-position masks (zero wrap-around / cross-sample / padded taps).
    r_idx = lax.broadcasted_iota(jnp.int32, (rows, 1), 0) % nblk
    not_first = r_idx != 0                                   # t > 0 inside each sample
    not_last = r_idx != nblk - 1                             # t < nblk-1

    def shift_down(x):                                       # row t <- row t-1 (0 at sample start)
        return jnp.where(not_first, pltpu.roll(x, 1, axis=0), 0.0)

    def shift_up(x):                                         # row t <- row t+1 (0 at sample end)
        return jnp.where(not_last, pltpu.roll(x, rows - 1, axis=0), 0.0)

    def affine_relu(acc, s_ref, b_ref):                      # folded BN (eval) + bias + ReLU (f32)
        return jnp.maximum(acc * s_ref[...] + b_ref[...], 0.0)

    def mm(a, w_ref):                                        # bf16 MXU dot, f32 accumulate
        return jnp.dot(a.astype(bf16), w_ref[...], preferred_element_type=f32)

    # conv1 (k=5, pad=2, s=1): in-kernel im2col over folded-x4 input blocks.
    x = x_ref[...]                                           # (rows, 4*C) f32
    y = mm(shift_down(x), w1p_ref) + mm(x, w1c_ref) + mm(shift_up(x), w1n_ref)
    f1 = affine_relu(y, s1_ref, b1_ref)                      # (rows, 128), folded x4

    # conv2 (k=3, pad=1, s=2): prev-block tap + center block, output folded x2.
    y = mm(shift_down(f1), w2p_ref) + mm(f1, w2m_ref)
    f2 = affine_relu(y, s2_ref, b2_ref)                      # (rows, 128), folded x2

    # conv3 (k=3, pad=1, s=2): prev-block tap + center block, plain layout out.
    y = mm(shift_down(f2), w3p_ref) + mm(f2, w3m_ref)
    f3 = affine_relu(y, s3_ref, b3_ref)                      # (rows, 128)

    # conv4 (k=3, pad=1, s=1): per-tap split, three K=128 dots.
    y = mm(shift_down(f3), w4p_ref) + mm(f3, w4m_ref) + mm(shift_up(f3), w4n_ref)
    h4 = affine_relu(y, s4_ref, b4_ref)                      # (rows, 256)

    # Adaptive avg+max pool over each sample's nblk spatial rows (single reductions).
    h = h4.reshape(batch, nblk, 256)                         # nblk multiple of 8 -> layout-free
    avg = jnp.mean(h, axis=1)                                # (B, 256)
    mx = jnp.max(h, axis=1)                                  # (B, 256)

    # Linear(512,128) + BN + ReLU — avg/max halves as two dots (Dropout = identity).
    z = mm(avg, wl1a_ref) + mm(mx, wl1m_ref)                 # (B, 128)
    z = jnp.maximum(z * sl1_ref[...] + bl1_ref[...], 0.0)

    # Linear(128,1) + Softplus — f32 lane reduction (avoids a degenerate N=1 MXU matmul).
    o = jnp.sum(z * wl2_ref[...], axis=1, keepdims=True) + bl2_ref[...]    # (B, 1)
    out_ref[...] = _softplus(o)


def pad_channels(x_ncl, key):
    """Glue equivalent of CustomCNN.pad_channels (deterministic noise)."""
    c = x_ncl.shape[1]
    if c == IN_CHANNELS:
        return x_ncl
    if c < IN_CHANNELS:
        noise = 0.1 * jax.random.normal(
            key, (x_ncl.shape[0], IN_CHANNELS - c, x_ncl.shape[2]), jnp.float32)
        return jnp.concatenate([x_ncl, noise], axis=1)
    return x_ncl[:, :IN_CHANNELS, :]


@jax.jit
def custom_cnn_forward(x_ncl, flat_params):
    """x_ncl: (B, C=8, L) float32, PyTorch NCL convention.  L must be a multiple of 4."""
    B, C, L = x_ncl.shape
    nblk = L // 4
    # Only layout plumbing outside the kernel: NCL -> NLC -> (B*nblk, 4*C).
    x = jnp.transpose(x_ncl, (0, 2, 1)).reshape(B * nblk, 4 * C).astype(jnp.float32)

    kernel = functools.partial(cnn_kernel, batch=B, nblk=nblk)
    vmem = pl.BlockSpec(memory_space=pltpu.MemorySpace.VMEM)
    # TODO(synk): the (1,1) bl2 scalar could live in SMEM and the (B,1) output could
    # be padded to a 128-lane slab; skipped as it is not a measurable win at this size.
    return pl.pallas_call(
        kernel,
        out_shape=jax.ShapeDtypeStruct((B, 1), jnp.float32),
        in_specs=[vmem] * (1 + len(flat_params)),
        out_specs=vmem,
    )(x, *flat_params)


def make_params(key):
    """Deterministic synthetic parameters.

    Returns (kernel-layout flat list, pytorch-layout dict).  The kernel layout has
    the tap/stride structure folded into per-tap block-structured weight matrices
    and BN(eval)+bias folded into pre-tiled per-channel scale/bias.
    """
    flat = []
    ref = {}
    convs = []
    for i, (cin, cout, k, _pad, _stride) in enumerate(CONV_CFG):
        key, *ks = jax.random.split(key, 7)
        w = jax.random.normal(ks[0], (cout, cin, k), jnp.float32) / jnp.sqrt(cin * k)
        cb = 0.05 * jax.random.normal(ks[1], (cout,), jnp.float32)
        gamma = 1.0 + 0.1 * jax.random.normal(ks[2], (cout,), jnp.float32)
        beta = 0.05 * jax.random.normal(ks[3], (cout,), jnp.float32)
        rmean = 0.05 * jax.random.normal(ks[4], (cout,), jnp.float32)
        rvar = jax.random.uniform(ks[5], (cout,), jnp.float32, 0.5, 1.5)
        s = gamma / jnp.sqrt(rvar + BN_EPS)
        scale = s
        bias = (cb - rmean) * s + beta
        ref[f"conv{i}"] = (w, scale, bias)
        convs.append((jnp.transpose(w, (2, 1, 0)), scale, bias))   # (K, Cin, Cout)

    bf16 = jnp.bfloat16
    C = IN_CHANNELS

    # conv1: window x[4t-2 .. 4t+5] split over prev / center / next folded blocks.
    wt, scale, bias = convs[0]                                     # (5, 8, 32)
    w1p = jnp.zeros((4 * C, 128), jnp.float32)
    w1c = jnp.zeros((4 * C, 128), jnp.float32)
    w1n = jnp.zeros((4 * C, 128), jnp.float32)
    for r in range(4):                                             # output sub-position
        for k in range(5):                                         # tap
            j = r + k - 2                                          # input pos relative to block t
            if j < 0:
                w1p = w1p.at[(j + 4) * C:(j + 5) * C, r * 32:(r + 1) * 32].set(wt[k])
            elif j < 4:
                w1c = w1c.at[j * C:(j + 1) * C, r * 32:(r + 1) * 32].set(wt[k])
            else:
                w1n = w1n.at[(j - 4) * C:(j - 3) * C, r * 32:(r + 1) * 32].set(wt[k])
    flat += [w1p.astype(bf16), w1c.astype(bf16), w1n.astype(bf16),
             jnp.tile(scale, 4).reshape(1, 128), jnp.tile(bias, 4).reshape(1, 128)]

    # conv2 (stride 2): inputs a1[4t-1+m], m=2q+k; m=0 comes from the previous block.
    wt, scale, bias = convs[1]                                     # (3, 32, 64)
    w2p = jnp.zeros((128, 128), jnp.float32)
    w2m = jnp.zeros((128, 128), jnp.float32)
    for q in range(2):                                             # output sub-position
        for k in range(3):
            m = 2 * q + k
            if m == 0:
                w2p = w2p.at[96:128, q * 64:(q + 1) * 64].set(wt[k])
            else:
                w2m = w2m.at[(m - 1) * 32:m * 32, q * 64:(q + 1) * 64].set(wt[k])
    flat += [w2p.astype(bf16), w2m.astype(bf16),
             jnp.tile(scale, 2).reshape(1, 128), jnp.tile(bias, 2).reshape(1, 128)]

    # conv3 (stride 2): inputs a2[2t-1] (prev block), a2[2t], a2[2t+1] (center block).
    wt, scale, bias = convs[2]                                     # (3, 64, 128)
    w3p = jnp.zeros((128, 128), jnp.float32).at[64:128, :].set(wt[0])
    w3m = (jnp.zeros((128, 128), jnp.float32)
           .at[0:64, :].set(wt[1]).at[64:128, :].set(wt[2]))
    flat += [w3p.astype(bf16), w3m.astype(bf16),
             scale.reshape(1, 128), bias.reshape(1, 128)]

    # conv4 (stride 1): plain per-tap split.
    wt, scale, bias = convs[3]                                     # (3, 128, 256)
    flat += [wt[0].astype(bf16), wt[1].astype(bf16), wt[2].astype(bf16),
             scale.reshape(1, 256), bias.reshape(1, 256)]

    # regressor: Linear(512,128)+BN folded (split into avg/max halves), Linear(128,1)
    key, *ks = jax.random.split(key, 9)
    w1fc = jax.random.normal(ks[0], (128, 512), jnp.float32) / jnp.sqrt(512.0)
    b1fc = 0.05 * jax.random.normal(ks[1], (128,), jnp.float32)
    gamma = 1.0 + 0.1 * jax.random.normal(ks[2], (128,), jnp.float32)
    beta = 0.05 * jax.random.normal(ks[3], (128,), jnp.float32)
    rmean = 0.05 * jax.random.normal(ks[4], (128,), jnp.float32)
    rvar = jax.random.uniform(ks[5], (128,), jnp.float32, 0.5, 1.5)
    s = gamma / jnp.sqrt(rvar + BN_EPS)
    sl1 = s
    bl1 = (b1fc - rmean) * s + beta
    w2fc = jax.random.normal(ks[6], (1, 128), jnp.float32) / jnp.sqrt(128.0)
    b2fc = 0.05 * jax.random.normal(ks[7], (1,), jnp.float32)
    flat += [w1fc[:, :256].T.astype(bf16), w1fc[:, 256:].T.astype(bf16),
             sl1.reshape(1, 128), bl1.reshape(1, 128),
             w2fc.reshape(1, 128), b2fc.reshape(1, 1)]
    ref["lin"] = (w1fc, sl1, bl1, w2fc, b2fc)
    return flat, ref


def reference_forward(x_ncl, ref):
    """Pure-JAX reference (PyTorch NCL layout, f32 HIGHEST) for correctness checking."""
    h = x_ncl.astype(jnp.float32)
    for i, (_cin, _cout, _k, pad, stride) in enumerate(CONV_CFG):
        w, scale, bias = ref[f"conv{i}"]
        h = lax.conv_general_dilated(h, w, window_strides=(stride,),
                                     padding=[(pad, pad)],
                                     dimension_numbers=("NCH", "OIH", "NCH"),
                                     precision=lax.Precision.HIGHEST)
        h = h * scale[None, :, None] + bias[None, :, None]
        h = jnp.maximum(h, 0.0)
    avg = jnp.mean(h, axis=-1)
    mx = jnp.max(h, axis=-1)
    feat = jnp.concatenate([avg, mx], axis=1)                      # (B, 512)
    w1, sl1, bl1, w2, b2 = ref["lin"]
    z = jnp.matmul(feat, w1.T, precision=lax.Precision.HIGHEST) * sl1 + bl1
    z = jnp.maximum(z, 0.0)
    z = jnp.matmul(z, w2.T, precision=lax.Precision.HIGHEST) + b2
    return _softplus(z)


if __name__ == "__main__":
    root = jax.random.PRNGKey(0)
    pkey, xkey, nkey = jax.random.split(root, 3)

    flat_params, ref_params = make_params(pkey)

    B, C, L = 2, IN_CHANNELS, 64
    x = jax.random.normal(xkey, (B, C, L), jnp.float32)            # PyTorch NCL input
    x = pad_channels(x, nkey)                                      # identity (C == in_channels)

    out = custom_cnn_forward(x, tuple(flat_params))
    out = jax.block_until_ready(out)

    assert out.shape == (B, 1), out.shape
    assert bool(jnp.all(jnp.isfinite(out)))

    ref_out = reference_forward(x, ref_params)
    # bf16 MXU operands vs an all-f32 HIGHEST reference -> slightly looser tolerance;
    # element-wise work stays f32, so this still catches structural bugs.
    if not bool(jnp.allclose(out, ref_out, rtol=2e-2, atol=2e-2)):
        raise AssertionError(
            f"mismatch: pallas={out.tolist()} ref={ref_out.tolist()}")

    print("KERNEL_OK")
</pallas_src>

<mosaic_0001>
module attributes {stable_mosaic.version = 11 : i64} {
  func.func @cnn_kernel(%arg0: memref<32x32xf32, #tpu.memory_space<vmem>>, %arg1: memref<32x128xbf16, #tpu.memory_space<vmem>>, %arg2: memref<32x128xbf16, #tpu.memory_space<vmem>>, %arg3: memref<32x128xbf16, #tpu.memory_space<vmem>>, %arg4: memref<1x128xf32, #tpu.memory_space<vmem>>, %arg5: memref<1x128xf32, #tpu.memory_space<vmem>>, %arg6: memref<128x128xbf16, #tpu.memory_space<vmem>>, %arg7: memref<128x128xbf16, #tpu.memory_space<vmem>>, %arg8: memref<1x128xf32, #tpu.memory_space<vmem>>, %arg9: memref<1x128xf32, #tpu.memory_space<vmem>>, %arg10: memref<128x128xbf16, #tpu.memory_space<vmem>>, %arg11: memref<128x128xbf16, #tpu.memory_space<vmem>>, %arg12: memref<1x128xf32, #tpu.memory_space<vmem>>, %arg13: memref<1x128xf32, #tpu.memory_space<vmem>>, %arg14: memref<128x256xbf16, #tpu.memory_space<vmem>>, %arg15: memref<128x256xbf16, #tpu.memory_space<vmem>>, %arg16: memref<128x256xbf16, #tpu.memory_space<vmem>>, %arg17: memref<1x256xf32, #tpu.memory_space<vmem>>, %arg18: memref<1x256xf32, #tpu.memory_space<vmem>>, %arg19: memref<256x128xbf16, #tpu.memory_space<vmem>>, %arg20: memref<256x128xbf16, #tpu.memory_space<vmem>>, %arg21: memref<1x128xf32, #tpu.memory_space<vmem>>, %arg22: memref<1x128xf32, #tpu.memory_space<vmem>>, %arg23: memref<1x128xf32, #tpu.memory_space<vmem>>, %arg24: memref<1x1xf32, #tpu.memory_space<vmem>>, %arg25: memref<2x1xf32, #tpu.memory_space<vmem>>) attributes {dimension_semantics = [], scalar_prefetch = 0 : i64, scratch_operands = 0 : i64, tpu.core_type = #tpu.core_type<tc>} {
    %0 = tpu.iota {dimensions = array<i32: 0>} : vector<32x1xi32>
    %c16_i32 = arith.constant 16 : i32
    %c0_i32 = arith.constant 0 : i32
    %1 = arith.cmpi eq, %c16_i32, %c0_i32 : i32
    %c1_i32 = arith.constant 1 : i32
    %2 = arith.select %1, %c1_i32, %c16_i32 : i32
    %3 = vector.broadcast %2 : i32 to vector<32x1xi32>
    %4 = arith.remsi %0, %3 : vector<32x1xi32>
    %c0_i32_0 = arith.constant 0 : i32
    %5 = vector.broadcast %c0_i32_0 : i32 to vector<32x1xi32>
    %6 = arith.cmpi ne, %4, %5 : vector<32x1xi32>
    %c0_i32_1 = arith.constant 0 : i32
    %7 = vector.broadcast %c0_i32_1 : i32 to vector<32x1xi32>
    %8 = arith.cmpi slt, %4, %7 : vector<32x1xi32>
    %c0_i32_2 = arith.constant 0 : i32
    %9 = arith.cmpi slt, %2, %c0_i32_2 : i32
    %10 = vector.broadcast %9 : i1 to vector<32x1xi1>
    %11 = vector.broadcast %10 : vector<32x1xi1> to vector<32x1xi1>
    %12 = arith.xori %8, %11 : vector<32x1xi1>
    %13 = arith.andi %12, %6 : vector<32x1xi1>
    %14 = vector.broadcast %2 : i32 to vector<32x1xi32>
    %15 = arith.addi %4, %14 : vector<32x1xi32>
    %16 = arith.select %13, %15, %4 : vector<32x1xi1>, vector<32x1xi32>
    %c0_i32_3 = arith.constant 0 : i32
    %17 = vector.broadcast %c0_i32_3 : i32 to vector<32x1xi32>
    %18 = arith.cmpi ne, %16, %17 : vector<32x1xi32>
    %c15_i32 = arith.constant 15 : i32
    %19 = vector.broadcast %c15_i32 : i32 to vector<32x1xi32>
    %20 = arith.cmpi ne, %16, %19 : vector<32x1xi32>
    %c0 = arith.constant 0 : index
    %c0_4 = arith.constant 0 : index
    %21 = vector.load %arg0[%c0, %c0_4] : memref<32x32xf32, #tpu.memory_space<vmem>>, vector<32x32xf32>
    %c1_i32_5 = arith.constant 1 : i32
    %22 = tpu.dynamic_rotate %21 by %c1_i32_5 dim 0 : vector<32x32xf32>, i32 -> vector<32x32xf32>
    %cst = arith.constant 0.000000e+00 : f32
    %23 = vector.shape_cast %18 : vector<32x1xi1> to vector<32x1xi1>
    %24 = vector.broadcast %23 : vector<32x1xi1> to vector<32x32xi1>
    %25 = vector.broadcast %cst : f32 to vector<32x32xf32>
    %26 = arith.select %24, %22, %25 : vector<32x32xi1>, vector<32x32xf32>
    %27 = arith.truncf %26 : vector<32x32xf32> to vector<32x32xbf16>
    %c0_6 = arith.constant 0 : index
    %c0_7 = arith.constant 0 : index
    %28 = vector.load %arg1[%c0_6, %c0_7] : memref<32x128xbf16, #tpu.memory_space<vmem>>, vector<32x128xbf16>
    %cst_8 = arith.constant dense<0.000000e+00> : vector<32x128xf32>
    %29 = tpu.matmul %27, %28, %cst_8 {dimension_numbers = #tpu.dot_dimension_numbers<[1], [0], [0], [1], [0, 0, 1, 1], [], []>} : vector<32x32xbf16>, vector<32x128xbf16>, vector<32x128xf32> -> vector<32x128xf32>
    %30 = arith.truncf %21 : vector<32x32xf32> to vector<32x32xbf16>
    %c0_9 = arith.constant 0 : index
    %c0_10 = arith.constant 0 : index
    %31 = vector.load %arg2[%c0_9, %c0_10] : memref<32x128xbf16, #tpu.memory_space<vmem>>, vector<32x128xbf16>
    %cst_11 = arith.constant dense<0.000000e+00> : vector<32x128xf32>
    %32 = tpu.matmul %30, %31, %cst_11 {dimension_numbers = #tpu.dot_dimension_numbers<[1], [0], [0], [1], [0, 0, 1, 1], [], []>} : vector<32x32xbf16>, vector<32x128xbf16>, vector<32x128xf32> -> vector<32x128xf32>
    %33 = arith.addf %29, %32 : vector<32x128xf32>
    %c31_i32 = arith.constant 31 : i32
    %34 = tpu.dynamic_rotate %21 by %c31_i32 dim 0 : vector<32x32xf32>, i32 -> vector<32x32xf32>
    %cst_12 = arith.constant 0.000000e+00 : f32
    %35 = vector.shape_cast %20 : vector<32x1xi1> to vector<32x1xi1>
    %36 = vector.broadcast %35 : vector<32x1xi1> to vector<32x32xi1>
    %37 = vector.broadcast %cst_12 : f32 to vector<32x32xf32>
    %38 = arith.select %36, %34, %37 : vector<32x32xi1>, vector<32x32xf32>
    %39 = arith.truncf %38 : vector<32x32xf32> to vector<32x32xbf16>
    %c0_13 = arith.constant 0 : index
    %c0_14 = arith.constant 0 : index
    %40 = vector.load %arg3[%c0_13, %c0_14] : memref<32x128xbf16, #tpu.memory_space<vmem>>, vector<32x128xbf16>
    %cst_15 = arith.constant dense<0.000000e+00> : vector<32x128xf32>
    %41 = tpu.matmul %39, %40, %cst_15 {dimension_numbers = #tpu.dot_dimension_numbers<[1], [0], [0], [1], [0, 0, 1, 1], [], []>} : vector<32x32xbf16>, vector<32x128xbf16>, vector<32x128xf32> -> vector<32x128xf32>
    %42 = arith.addf %33, %41 : vector<32x128xf32>
    %c0_16 = arith.constant 0 : index
    %c0_17 = arith.constant 0 : index
    %43 = vector.load %arg4[%c0_16, %c0_17] : memref<1x128xf32, #tpu.memory_space<vmem>>, vector<1x128xf32>
    %44 = vector.broadcast %43 : vector<1x128xf32> to vector<32x128xf32>
    %45 = arith.mulf %42, %44 : vector<32x128xf32>
    %c0_18 = arith.constant 0 : index
    %c0_19 = arith.constant 0 : index
    %46 = vector.load %arg5[%c0_18, %c0_19] : memref<1x128xf32, #tpu.memory_space<vmem>>, vector<1x128xf32>
    %47 = vector.broadcast %46 : vector<1x128xf32> to vector<32x128xf32>
    %48 = arith.addf %45, %47 : vector<32x128xf32>
    %cst_20 = arith.constant 0.000000e+00 : f32
    %49 = vector.broadcast %cst_20 : f32 to vector<32x128xf32>
    %50 = arith.maximumf %48, %49 : vector<32x128xf32>
    %c1_i32_21 = arith.constant 1 : i32
    %51 = tpu.dynamic_rotate %50 by %c1_i32_21 dim 0 : vector<32x128xf32>, i32 -> vector<32x128xf32>
    %cst_22 = arith.constant 0.000000e+00 : f32
    %52 = vector.shape_cast %18 : vector<32x1xi1> to vector<32x1xi1>
    %53 = vector.broadcast %52 : vector<32x1xi1> to vector<32x128xi1>
    %54 = vector.broadcast %cst_22 : f32 to vector<32x128xf32>
    %55 = arith.select %53, %51, %54 : vector<32x128xi1>, vector<32x128xf32>
    %56 = arith.truncf %55 : vector<32x128xf32> to vector<32x128xbf16>
    %c0_23 = arith.constant 0 : index
    %c0_24 = arith.constant 0 : index
    %57 = vector.load %arg6[%c0_23, %c0_24] : memref<128x128xbf16, #tpu.memory_space<vmem>>, vector<128x128xbf16>
    %cst_25 = arith.constant dense<0.000000e+00> : vector<32x128xf32>
    %58 = tpu.matmul %56, %57, %cst_25 {dimension_numbers = #tpu.dot_dimension_numbers<[1], [0], [0], [1], [0, 0, 1, 1], [], []>} : vector<32x128xbf16>, vector<128x128xbf16>, vector<32x128xf32> -> vector<32x128xf32>
    %59 = arith.truncf %50 : vector<32x128xf32> to vector<32x128xbf16>
    %c0_26 = arith.constant 0 : index
    %c0_27 = arith.constant 0 : index
    %60 = vector.load %arg7[%c0_26, %c0_27] : memref<128x128xbf16, #tpu.memory_space<vmem>>, vector<128x128xbf16>
    %cst_28 = arith.constant dense<0.000000e+00> : vector<32x128xf32>
    %61 = tpu.matmul %59, %60, %cst_28 {dimension_numbers = #tpu.dot_dimension_numbers<[1], [0], [0], [1], [0, 0, 1, 1], [], []>} : vector<32x128xbf16>, vector<128x128xbf16>, vector<32x128xf32> -> vector<32x128xf32>
    %62 = arith.addf %58, %61 : vector<32x128xf32>
    %c0_29 = arith.constant 0 : index
    %c0_30 = arith.constant 0 : index
    %63 = vector.load %arg8[%c0_29, %c0_30] : memref<1x128xf32, #tpu.memory_space<vmem>>, vector<1x128xf32>
    %64 = vector.broadcast %63 : vector<1x128xf32> to vector<32x128xf32>
    %65 = arith.mulf %62, %64 : vector<32x128xf32>
    %c0_31 = arith.constant 0 : index
    %c0_32 = arith.constant 0 : index
    %66 = vector.load %arg9[%c0_31, %c0_32] : memref<1x128xf32, #tpu.memory_space<vmem>>, vector<1x128xf32>
    %67 = vector.broadcast %66 : vector<1x128xf32> to vector<32x128xf32>
    %68 = arith.addf %65, %67 : vector<32x128xf32>
    %cst_33 = arith.constant 0.000000e+00 : f32
    %69 = vector.broadcast %cst_33 : f32 to vector<32x128xf32>
    %70 = arith.maximumf %68, %69 : vector<32x128xf32>
    %c1_i32_34 = arith.constant 1 : i32
    %71 = tpu.dynamic_rotate %70 by %c1_i32_34 dim 0 : vector<32x128xf32>, i32 -> vector<32x128xf32>
    %cst_35 = arith.constant 0.000000e+00 : f32
    %72 = vector.shape_cast %18 : vector<32x1xi1> to vector<32x1xi1>
    %73 = vector.broadcast %72 : vector<32x1xi1> to vector<32x128xi1>
    %74 = vector.broadcast %cst_35 : f32 to vector<32x128xf32>
    %75 = arith.select %73, %71, %74 : vector<32x128xi1>, vector<32x128xf32>
    %76 = arith.truncf %75 : vector<32x128xf32> to vector<32x128xbf16>
    %c0_36 = arith.constant 0 : index
    %c0_37 = arith.constant 0 : index
    %77 = vector.load %arg10[%c0_36, %c0_37] : memref<128x128xbf16, #tpu.memory_space<vmem>>, vector<128x128xbf16>
    %cst_38 = arith.constant dense<0.000000e+00> : vector<32x128xf32>
    %78 = tpu.matmul %76, %77, %cst_38 {dimension_numbers = #tpu.dot_dimension_numbers<[1], [0], [0], [1], [0, 0, 1, 1], [], []>} : vector<32x128xbf16>, vector<128x128xbf16>, vector<32x128xf32> -> vector<32x128xf32>
    %79 = arith.truncf %70 : vector<32x128xf32> to vector<32x128xbf16>
    %c0_39 = arith.constant 0 : index
    %c0_40 = arith.constant 0 : index
    %80 = vector.load %arg11[%c0_39, %c0_40] : memref<128x128xbf16, #tpu.memory_space<vmem>>, vector<128x128xbf16>
    %cst_41 = arith.constant dense<0.000000e+00> : vector<32x128xf32>
    %81 = tpu.matmul %79, %80, %cst_41 {dimension_numbers = #tpu.dot_dimension_numbers<[1], [0], [0], [1], [0, 0, 1, 1], [], []>} : vector<32x128xbf16>, vector<128x128xbf16>, vector<32x128xf32> -> vector<32x128xf32>
    %82 = arith.addf %78, %81 : vector<32x128xf32>
    %c0_42 = arith.constant 0 : index
    %c0_43 = arith.constant 0 : index
    %83 = vector.load %arg12[%c0_42, %c0_43] : memref<1x128xf32, #tpu.memory_space<vmem>>, vector<1x128xf32>
    %84 = vector.broadcast %83 : vector<1x128xf32> to vector<32x128xf32>
    %85 = arith.mulf %82, %84 : vector<32x128xf32>
    %c0_44 = arith.constant 0 : index
    %c0_45 = arith.constant 0 : index
    %86 = vector.load %arg13[%c0_44, %c0_45] : memref<1x128xf32, #tpu.memory_space<vmem>>, vector<1x128xf32>
    %87 = vector.broadcast %86 : vector<1x128xf32> to vector<32x128xf32>
    %88 = arith.addf %85, %87 : vector<32x128xf32>
    %cst_46 = arith.constant 0.000000e+00 : f32
    %89 = vector.broadcast %cst_46 : f32 to vector<32x128xf32>
    %90 = arith.maximumf %88, %89 : vector<32x128xf32>
    %c1_i32_47 = arith.constant 1 : i32
    %91 = tpu.dynamic_rotate %90 by %c1_i32_47 dim 0 : vector<32x128xf32>, i32 -> vector<32x128xf32>
    %cst_48 = arith.constant 0.000000e+00 : f32
    %92 = vector.shape_cast %18 : vector<32x1xi1> to vector<32x1xi1>
    %93 = vector.broadcast %92 : vector<32x1xi1> to vector<32x128xi1>
    %94 = vector.broadcast %cst_48 : f32 to vector<32x128xf32>
    %95 = arith.select %93, %91, %94 : vector<32x128xi1>, vector<32x128xf32>
    %96 = arith.truncf %95 : vector<32x128xf32> to vector<32x128xbf16>
    %c0_49 = arith.constant 0 : index
    %c0_50 = arith.constant 0 : index
    %97 = vector.load %arg14[%c0_49, %c0_50] : memref<128x256xbf16, #tpu.memory_space<vmem>>, vector<128x256xbf16>
    %cst_51 = arith.constant dense<0.000000e+00> : vector<32x256xf32>
    %98 = tpu.matmul %96, %97, %cst_51 {dimension_numbers = #tpu.dot_dimension_numbers<[1], [0], [0], [1], [0, 0, 1, 1], [], []>} : vector<32x128xbf16>, vector<128x256xbf16>, vector<32x256xf32> -> vector<32x256xf32>
    %99 = arith.truncf %90 : vector<32x128xf32> to vector<32x128xbf16>
    %c0_52 = arith.constant 0 : index
    %c0_53 = arith.constant 0 : index
    %100 = vector.load %arg15[%c0_52, %c0_53] : memref<128x256xbf16, #tpu.memory_space<vmem>>, vector<128x256xbf16>
    %cst_54 = arith.constant dense<0.000000e+00> : vector<32x256xf32>
    %101 = tpu.matmul %99, %100, %cst_54 {dimension_numbers = #tpu.dot_dimension_numbers<[1], [0], [0], [1], [0, 0, 1, 1], [], []>} : vector<32x128xbf16>, vector<128x256xbf16>, vector<32x256xf32> -> vector<32x256xf32>
    %102 = arith.addf %98, %101 : vector<32x256xf32>
    %c31_i32_55 = arith.constant 31 : i32
    %103 = tpu.dynamic_rotate %90 by %c31_i32_55 dim 0 : vector<32x128xf32>, i32 -> vector<32x128xf32>
    %cst_56 = arith.constant 0.000000e+00 : f32
    %104 = vector.shape_cast %20 : vector<32x1xi1> to vector<32x1xi1>
    %105 = vector.broadcast %104 : vector<32x1xi1> to vector<32x128xi1>
    %106 = vector.broadcast %cst_56 : f32 to vector<32x128xf32>
    %107 = arith.select %105, %103, %106 : vector<32x128xi1>, vector<32x128xf32>
    %108 = arith.truncf %107 : vector<32x128xf32> to vector<32x128xbf16>
    %c0_57 = arith.constant 0 : index
    %c0_58 = arith.constant 0 : index
    %109 = vector.load %arg16[%c0_57, %c0_58] : memref<128x256xbf16, #tpu.memory_space<vmem>>, vector<128x256xbf16>
    %cst_59 = arith.constant dense<0.000000e+00> : vector<32x256xf32>
    %110 = tpu.matmul %108, %109, %cst_59 {dimension_numbers = #tpu.dot_dimension_numbers<[1], [0], [0], [1], [0, 0, 1, 1], [], []>} : vector<32x128xbf16>, vector<128x256xbf16>, vector<32x256xf32> -> vector<32x256xf32>
    %111 = arith.addf %102, %110 : vector<32x256xf32>
    %c0_60 = arith.constant 0 : index
    %c0_61 = arith.constant 0 : index
    %112 = vector.load %arg17[%c0_60, %c0_61] : memref<1x256xf32, #tpu.memory_space<vmem>>, vector<1x256xf32>
    %113 = vector.broadcast %112 : vector<1x256xf32> to vector<32x256xf32>
    %114 = arith.mulf %111, %113 : vector<32x256xf32>
    %c0_62 = arith.constant 0 : index
    %c0_63 = arith.constant 0 : index
    %115 = vector.load %arg18[%c0_62, %c0_63] : memref<1x256xf32, #tpu.memory_space<vmem>>, vector<1x256xf32>
    %116 = vector.broadcast %115 : vector<1x256xf32> to vector<32x256xf32>
    %117 = arith.addf %114, %116 : vector<32x256xf32>
    %cst_64 = arith.constant 0.000000e+00 : f32
    %118 = vector.broadcast %cst_64 : f32 to vector<32x256xf32>
    %119 = arith.maximumf %117, %118 : vector<32x256xf32>
    %120 = vector.shape_cast %119 : vector<32x256xf32> to vector<2x16x256xf32>
    %cst_65 = arith.constant dense<0.000000e+00> : vector<2x256xf32>
    %121 = vector.multi_reduction <add>, %120, %cst_65 [1] : vector<2x16x256xf32> to vector<2x256xf32>
    %cst_66 = arith.constant 1.600000e+01 : f32
    %122 = vector.broadcast %cst_66 : f32 to vector<2x256xf32>
    %123 = arith.divf %121, %122 : vector<2x256xf32>
    %cst_67 = arith.constant dense<0xFF800000> : vector<2x256xf32>
    %124 = vector.multi_reduction <maximumf>, %120, %cst_67 [1] : vector<2x16x256xf32> to vector<2x256xf32>
    %125 = arith.truncf %123 : vector<2x256xf32> to vector<2x256xbf16>
    %c0_68 = arith.constant 0 : index
    %c0_69 = arith.constant 0 : index
    %126 = vector.load %arg19[%c0_68, %c0_69] : memref<256x128xbf16, #tpu.memory_space<vmem>>, vector<256x128xbf16>
    %cst_70 = arith.constant dense<0.000000e+00> : vector<2x128xf32>
    %127 = tpu.matmul %125, %126, %cst_70 {dimension_numbers = #tpu.dot_dimension_numbers<[1], [0], [0], [1], [0, 0, 1, 1], [], []>} : vector<2x256xbf16>, vector<256x128xbf16>, vector<2x128xf32> -> vector<2x128xf32>
    %128 = arith.truncf %124 : vector<2x256xf32> to vector<2x256xbf16>
    %c0_71 = arith.constant 0 : index
    %c0_72 = arith.constant 0 : index
    %129 = vector.load %arg20[%c0_71, %c0_72] : memref<256x128xbf16, #tpu.memory_space<vmem>>, vector<256x128xbf16>
    %cst_73 = arith.constant dense<0.000000e+00> : vector<2x128xf32>
    %130 = tpu.matmul %128, %129, %cst_73 {dimension_numbers = #tpu.dot_dimension_numbers<[1], [0], [0], [1], [0, 0, 1, 1], [], []>} : vector<2x256xbf16>, vector<256x128xbf16>, vector<2x128xf32> -> vector<2x128xf32>
    %131 = arith.addf %127, %130 : vector<2x128xf32>
    %c0_74 = arith.constant 0 : index
    %c0_75 = arith.constant 0 : index
    %132 = vector.load %arg21[%c0_74, %c0_75] : memref<1x128xf32, #tpu.memory_space<vmem>>, vector<1x128xf32>
    %133 = vector.broadcast %132 : vector<1x128xf32> to vector<2x128xf32>
    %134 = arith.mulf %131, %133 : vector<2x128xf32>
    %c0_76 = arith.constant 0 : index
    %c0_77 = arith.constant 0 : index
    %135 = vector.load %arg22[%c0_76, %c0_77] : memref<1x128xf32, #tpu.memory_space<vmem>>, vector<1x128xf32>
    %136 = vector.broadcast %135 : vector<1x128xf32> to vector<2x128xf32>
    %137 = arith.addf %134, %136 : vector<2x128xf32>
    %cst_78 = arith.constant 0.000000e+00 : f32
    %138 = vector.broadcast %cst_78 : f32 to vector<2x128xf32>
    %139 = arith.maximumf %137, %138 : vector<2x128xf32>
    %c0_79 = arith.constant 0 : index
    %c0_80 = arith.constant 0 : index
    %140 = vector.load %arg23[%c0_79, %c0_80] : memref<1x128xf32, #tpu.memory_space<vmem>>, vector<1x128xf32>
    %141 = vector.broadcast %140 : vector<1x128xf32> to vector<2x128xf32>
    %142 = arith.mulf %139, %141 : vector<2x128xf32>
    %cst_81 = arith.constant dense<0.000000e+00> : vector<2xf32>
    %143 = vector.multi_reduction <add>, %142, %cst_81 [1] : vector<2x128xf32> to vector<2xf32>
    %144 = vector.shape_cast %143 : vector<2xf32> to vector<2x1xf32>
    %c0_82 = arith.constant 0 : index
    %c0_83 = arith.constant 0 : index
    %145 = vector.load %arg24[%c0_82, %c0_83] : memref<1x1xf32, #tpu.memory_space<vmem>>, vector<1x1xf32>
    %146 = vector.broadcast %145 : vector<1x1xf32> to vector<2x1xf32>
    %147 = arith.addf %144, %146 : vector<2x1xf32>
    %cst_84 = arith.constant 2.000000e+01 : f32
    %148 = vector.broadcast %cst_84 : f32 to vector<2x1xf32>
    %149 = arith.cmpf ogt, %147, %148 : vector<2x1xf32>
    %cst_85 = arith.constant 2.000000e+01 : f32
    %150 = vector.broadcast %cst_85 : f32 to vector<2x1xf32>
    %151 = arith.minimumf %147, %150 : vector<2x1xf32>
    %152 = math.exp %151 : vector<2x1xf32>
    %153 = math.log1p %152 : vector<2x1xf32>
    %154 = arith.select %149, %147, %153 : vector<2x1xi1>, vector<2x1xf32>
    %c0_86 = arith.constant 0 : index
    %c0_87 = arith.constant 0 : index
    %155 = vector.load %arg25[%c0_86, %c0_87] : memref<2x1xf32, #tpu.memory_space<vmem>>, vector<2x1xf32>
    tpu.vector_store %arg25[%c0_86, %c0_87], %154 {strides = array<i32>} : memref<2x1xf32, #tpu.memory_space<vmem>>, vector<2x1xf32>,
    return
  }
}

</mosaic_0001>

<llo_original>
// kernel: custom_cnn_forward.1
$region0: #{custom_cnn_forward.1}
  #allocation0 [shape = 'u32[]', space=smem, size = 0x4, offset = 0x4, fixed_abs, tag = 'smem constant byte address 0x4 - core index']
  #allocation1 [shape = 'u32[144,128]{1,0:T(1,128)}', space=vmem, size = 0x12000, scoped, tag = 'internal scratch']
  #allocation2 [shape = 'f32[1,1]{1,0:T(1,128)S(1)}', space=vmem, size = 0x200, scoped, tag = 'scoped memory for custom_cnn_forward.1']
  %s0 = inlined_call_operand.vmem [shape: f32[32,32], index: 0, kind: input, shape index: {}]
  %s1 = inlined_call_operand.hbm [shape: bf16[32,128], index: 1, kind: input, shape index: {}]
  %s2 = inlined_call_operand.hbm [shape: bf16[32,128], index: 2, kind: input, shape index: {}]
  %s3 = inlined_call_operand.hbm [shape: bf16[32,128], index: 3, kind: input, shape index: {}]
  %s4 = inlined_call_operand.hbm [shape: f32[1,128], index: 4, kind: input, shape index: {}]
  %s5 = inlined_call_operand.hbm [shape: f32[1,128], index: 5, kind: input, shape index: {}]
  %s6 = inlined_call_operand.hbm [shape: bf16[128,128], index: 6, kind: input, shape index: {}]
  %s7 = inlined_call_operand.hbm [shape: bf16[128,128], index: 7, kind: input, shape index: {}]
  %s8 = inlined_call_operand.hbm [shape: f32[1,128], index: 8, kind: input, shape index: {}]
  %s9 = inlined_call_operand.hbm [shape: f32[1,128], index: 9, kind: input, shape index: {}]
  %s10 = inlined_call_operand.hbm [shape: bf16[128,128], index: 10, kind: input, shape index: {}]
  %s11 = inlined_call_operand.vmem [shape: bf16[128,128], index: 11, kind: input, shape index: {}]
  %s12 = inlined_call_operand.vmem [shape: f32[1,128], index: 12, kind: input, shape index: {}]
  %s13 = inlined_call_operand.vmem [shape: f32[1,128], index: 13, kind: input, shape index: {}]
  %s14 = inlined_call_operand.vmem [shape: bf16[128,256], index: 14, kind: input, shape index: {}]
  %s15 = inlined_call_operand.vmem [shape: bf16[128,256], index: 15, kind: input, shape index: {}]
  %s16 = inlined_call_operand.hbm [shape: bf16[128,256], index: 16, kind: input, shape index: {}]
  %s17 = inlined_call_operand.vmem [shape: f32[1,256], index: 17, kind: input, shape index: {}]
  %s18 = inlined_call_operand.hbm [shape: f32[1,256], index: 18, kind: input, shape index: {}]
  %s19 = inlined_call_operand.hbm [shape: bf16[256,128], index: 19, kind: input, shape index: {}]
  %s20 = inlined_call_operand.hbm [shape: bf16[256,128], index: 20, kind: input, shape index: {}]
  %s21 = inlined_call_operand.hbm [shape: f32[1,128], index: 21, kind: input, shape index: {}]
  %s22 = inlined_call_operand.hbm [shape: f32[1,128], index: 22, kind: input, shape index: {}]
  %s23 = inlined_call_operand.hbm [shape: f32[1,128], index: 23, kind: input, shape index: {}]
  %s24 = inlined_call_operand.<no memory space> [shape: f32[1,1], index: 24, kind: input, shape index: {}]
  %s25 = inlined_call_operand.vmem [shape: f32[2,1], index: 25, kind: output, shape index: {}]
  %s26 = sld [smem:[#allocation0]]
  $region178: #{custom_cnn_forward.1} parent=0
    _
  %s28 = ssub.s32 1, %s26
  %s29 = scalar_select 0, %s28, %s26
  %v30 = vstv %s24
  %31 = vst [vmem:[#allocation2] sm:$0x1] %v30
  $region1: #{custom_cnn_forward.1} parent=0
    #allocation3 [shape = 'u8[8192]{0}', space=vmem, size = 0x2000, scoped, tag = 'input window, operand 1, single buffered']
    #allocation4 [shape = 's32[1]{0}', space=sflag, size = 0x4, scoped, tag = 'scoped memory for custom_cnn_forward.1']
    #allocation5 [shape = 'u8[8192]{0}', space=vmem, size = 0x2000, scoped, tag = 'input window, operand 2, single buffered']
    #allocation6 [shape = 's32[1]{0}', space=sflag, size = 0x4, scoped, tag = 'scoped memory for custom_cnn_forward.1']
    #allocation7 [shape = 'u8[8192]{0}', space=vmem, size = 0x2000, scoped, tag = 'input window, operand 3, single buffered']
    #allocation8 [shape = 'u8[512]{0}', space=vmem, size = 0x400, scoped, tag = 'input window, operand 4, single buffered']
    #allocation9 [shape = 's32[1]{0}', space=sflag, size = 0x4, scoped, tag = 'scoped memory for custom_cnn_forward.1']
    #allocation10 [shape = 'u8[512]{0}', space=vmem, size = 0x400, scoped, tag = 'input window, operand 5, single buffered']
    #allocation11 [shape = 'u8[32768]{0}', space=vmem, size = 0x8000, scoped, tag = 'input window, operand 6, single buffered']
    #allocation12 [shape = 's32[1]{0}', space=sflag, size = 0x4, scoped, tag = 'scoped memory for custom_cnn_forward.1']
    #allocation13 [shape = 'u8[32768]{0}', space=vmem, size = 0x8000, scoped, tag = 'input window, operand 7, single buffered']
    #allocation14 [shape = 'u8[512]{0}', space=vmem, size = 0x400, scoped, tag = 'input window, operand 8, single buffered']
    #allocation15 [shape = 's32[1]{0}', space=sflag, size = 0x4, scoped, tag = 'scoped memory for custom_cnn_forward.1']
    #allocation16 [shape = 'u8[512]{0}', space=vmem, size = 0x400, scoped, tag = 'input window, operand 9, single buffered']
    #allocation17 [shape = 'u8[32768]{0}', space=vmem, size = 0x8000, scoped, tag = 'input window, operand 10, single buffered']
    #allocation18 [shape = 's32[1]{0}', space=sflag, size = 0x4, scoped, tag = 'scoped memory for custom_cnn_forward.1']
    #allocation19 [shape = 'u8[65536]{0}', space=vmem, size = 0x10000, scoped, tag = 'input window, operand 16, single buffered']
    #allocation20 [shape = 'u8[1024]{0}', space=vmem, size = 0x400, scoped, tag = 'input window, operand 18, single buffered']
    #allocation21 [shape = 's32[1]{0}', space=sflag, size = 0x4, scoped, tag = 'scoped memory for custom_cnn_forward.1']
    #allocation22 [shape = 'u8[65536]{0}', space=vmem, size = 0x10000, scoped, tag = 'input window, operand 19, single buffered']
    #allocation23 [shape = 'u8[65536]{0}', space=vmem, size = 0x10000, scoped, tag = 'input window, operand 20, single buffered']
    #allocation24 [shape = 's32[1]{0}', space=sflag, size = 0x4, scoped, tag = 'scoped memory for custom_cnn_forward.1']
    #allocation25 [shape = 'u8[512]{0}', space=vmem, size = 0x400, scoped, tag = 'input window, operand 21, single buffered']
    #allocation26 [shape = 'u8[512]{0}', space=vmem, size = 0x400, scoped, tag = 'input window, operand 22, single buffered']
    #allocation27 [shape = 's32[1]{0}', space=sflag, size = 0x4, scoped, tag = 'scoped memory for custom_cnn_forward.1']
    #allocation28 [shape = 'u8[512]{0}', space=vmem, size = 0x400, scoped, tag = 'input window, operand 23, single buffered']
    %32 = vsyncpa [#allocation4], 0
    %33 = vsyncpa [#allocation6], 0
    %34 = vsyncpa [#allocation9], 0
    %35 = vsyncpa [#allocation12], 0
    %36 = vsyncpa [#allocation15], 0
    %37 = vsyncpa [#allocation18], 0
    %38 = vsyncpa [#allocation21], 0
    %39 = vsyncpa [#allocation24], 0
    %40 = vsyncpa [#allocation27], 0
    // Predicated region
    $region2: #{custom_cnn_forward.1} parent=1 // pred_check
      _
    $region3: #{custom_cnn_forward.1} parent=1 // pred_check_branch
      %42 = sbr.rel (0) target = $region5
    $region4: #{custom_cnn_forward.1} parent=1 // pred_region
      _
    $region5: #{custom_cnn_forward.1} parent=1 // pred_fallthru
      _
    // Predicated region
    $region6: #{custom_cnn_forward.1} parent=1 // pred_check
      _
    $region7: #{custom_cnn_forward.1} parent=1 // pred_check_branch
      %44 = sbr.rel (0) target = $region9
    $region8: #{custom_cnn_forward.1} parent=1 // pred_region
      %s46 = ssub.s32 256, 256
      %47 = vsyncadd [#allocation4], %s46
      %s48 = sshll.u32 [#allocation3], 4
      %s49 = int_to_ptr.vmem [resolvable:$true] %s48
      %54 = dma.hbm_to_vmem [thread:$0]  %s1, 256, %s49, [#allocation4], 64, 64, 4
    $region9: #{custom_cnn_forward.1} parent=1 // pred_fallthru
      _
    // Predicated region
    $region10: #{custom_cnn_forward.1} parent=1 // pred_check
      _
    $region11: #{custom_cnn_forward.1} parent=1 // pred_check_branch
      %56 = sbr.rel (0) target = $region13
    $region12: #{custom_cnn_forward.1} parent=1 // pred_region
      %s58 = ssub.s32 256, 256
      %59 = vsyncadd [#allocation6], %s58
      %s60 = sshll.u32 [#allocation5], 4
      %s61 = int_to_ptr.vmem [resolvable:$true] %s60
      %66 = dma.hbm_to_vmem [thread:$0]  %s2, 256, %s61, [#allocation6], 64, 64, 4
    $region13: #{custom_cnn_forward.1} parent=1 // pred_fallthru
      _
    // Predicated region
    $region14: #{custom_cnn_forward.1} parent=1 // pred_check
      _
    $region15: #{custom_cnn_forward.1} parent=1 // pred_check_branch
      %68 = sbr.rel (0) target = $region17
    $region16: #{custom_cnn_forward.1} parent=1 // pred_region
      %s70 = ssub.s32 256, 256
      %71 = vsyncadd [#allocation6], %s70
      %s72 = sshll.u32 [#allocation7], 4
      %s73 = int_to_ptr.vmem [resolvable:$true] %s72
      %78 = dma.hbm_to_vmem [thread:$0]  %s3, 256, %s73, [#allocation6], 64, 64, 4
    $region17: #{custom_cnn_forward.1} parent=1 // pred_fallthru
      _
    // Predicated region
    $region18: #{custom_cnn_forward.1} parent=1 // pred_check
      _
    $region19: #{custom_cnn_forward.1} parent=1 // pred_check_branch
      %80 = sbr.rel (0) target = $region21
    $region20: #{custom_cnn_forward.1} parent=1 // pred_region
      %s82 = ssub.s32 16, 16
      %83 = vsyncadd [#allocation9], %s82
      %s85 = sshll.u32 [#allocation8], 4
      %s86 = int_to_ptr.vmem [resolvable:$true] %s85
      %88 = dma.hbm_to_vmem [thread:$0]  %s4, 16, %s86, [#allocation9]
    $region21: #{custom_cnn_forward.1} parent=1 // pred_fallthru
      _
    // Predicated region
    $region22: #{custom_cnn_forward.1} parent=1 // pred_check
      _
    $region23: #{custom_cnn_forward.1} parent=1 // pred_check_branch
      %90 = sbr.rel (0) target = $region25
    $region24: #{custom_cnn_forward.1} parent=1 // pred_region
      %s92 = ssub.s32 16, 16
      %93 = vsyncadd [#allocation9], %s92
      %s95 = sshll.u32 [#allocation10], 4
      %s96 = int_to_ptr.vmem [resolvable:$true] %s95
      %98 = dma.hbm_to_vmem [thread:$0]  %s5, 16, %s96, [#allocation9]
    $region25: #{custom_cnn_forward.1} parent=1 // pred_fallthru
      _
    // Predicated region
    $region26: #{custom_cnn_forward.1} parent=1 // pred_check
      _
    $region27: #{custom_cnn_forward.1} parent=1 // pred_check_branch
      %100 = sbr.rel (0) target = $region29
    $region28: #{custom_cnn_forward.1} parent=1 // pred_region
      %s102 = ssub.s32 1024, 1024
      %103 = vsyncadd [#allocation12], %s102
      %s104 = sshll.u32 [#allocation11], 4
      %s105 = int_to_ptr.vmem [resolvable:$true] %s104
      %110 = dma.hbm_to_vmem [thread:$0]  %s6, 1024, %s105, [#allocation12], 64, 64, 4
    $region29: #{custom_cnn_forward.1} parent=1 // pred_fallthru
      _
    // Predicated region
    $region30: #{custom_cnn_forward.1} parent=1 // pred_check
      _
    $region31: #{custom_cnn_forward.1} parent=1 // pred_check_branch
      %112 = sbr.rel (0) target = $region33
    $region32: #{custom_cnn_forward.1} parent=1 // pred_region
      %s114 = ssub.s32 1024, 1024
      %115 = vsyncadd [#allocation12], %s114
      %s116 = sshll.u32 [#allocation13], 4
      %s117 = int_to_ptr.vmem [resolvable:$true] %s116
      %122 = dma.hbm_to_vmem [thread:$0]  %s7, 1024, %s117, [#allocation12], 64, 64, 4
    $region33: #{custom_cnn_forward.1} parent=1 // pred_fallthru
      _
    // Predicated region
    $region34: #{custom_cnn_forward.1} parent=1 // pred_check
      _
    $region35: #{custom_cnn_forward.1} parent=1 // pred_check_branch
      %124 = sbr.rel (0) target = $region37
    $region36: #{custom_cnn_forward.1} parent=1 // pred_region
      %s126 = ssub.s32 16, 16
      %127 = vsyncadd [#allocation15], %s126
      %s129 = sshll.u32 [#allocation14], 4
      %s130 = int_to_ptr.vmem [resolvable:$true] %s129
      %132 = dma.hbm_to_vmem [thread:$0]  %s8, 16, %s130, [#allocation15]
    $region37: #{custom_cnn_forward.1} parent=1 // pred_fallthru
      _
    // Predicated region
    $region38: #{custom_cnn_forward.1} parent=1 // pred_check
      _
    $region39: #{custom_cnn_forward.1} parent=1 // pred_check_branch
      %134 = sbr.rel (0) target = $region41
    $region40: #{custom_cnn_forward.1} parent=1 // pred_region
      %s136 = ssub.s32 16, 16
      %137 = vsyncadd [#allocation15], %s136
      %s139 = sshll.u32 [#allocation16], 4
      %s140 = int_to_ptr.vmem [resolvable:$true] %s139
      %142 = dma.hbm_to_vmem [thread:$0]  %s9, 16, %s140, [#allocation15]
    $region41: #{custom_cnn_forward.1} parent=1 // pred_fallthru
      _
    // Predicated region
    $region42: #{custom_cnn_forward.1} parent=1 // pred_check
      _
    $region43: #{custom_cnn_forward.1} parent=1 // pred_check_branch
      %144 = sbr.rel (0) target = $region45
    $region44: #{custom_cnn_forward.1} parent=1 // pred_region
      %s146 = ssub.s32 1024, 1024
      %147 = vsyncadd [#allocation18], %s146
      %s148 = sshll.u32 [#allocation17], 4
      %s149 = int_to_ptr.vmem [resolvable:$true] %s148
      %154 = dma.hbm_to_vmem [thread:$0]  %s10, 1024, %s149, [#allocation18], 64, 64, 4
    $region45: #{custom_cnn_forward.1} parent=1 // pred_fallthru
      _
    // Predicated region
    $region46: #{custom_cnn_forward.1} parent=1 // pred_check
      _
    $region47: #{custom_cnn_forward.1} parent=1 // pred_check_branch
      %156 = sbr.rel (0) target = $region49
    $region48: #{custom_cnn_forward.1} parent=1 // pred_region
      _
    $region49: #{custom_cnn_forward.1} parent=1 // pred_fallthru
      _
    // Predicated region
    $region50: #{custom_cnn_forward.1} parent=1 // pred_check
      _
    $region51: #{custom_cnn_forward.1} parent=1 // pred_check_branch
      %158 = sbr.rel (0) target = $region53
    $region52: #{custom_cnn_forward.1} parent=1 // pred_region
      _
    $region53: #{custom_cnn_forward.1} parent=1 // pred_fallthru
      _
    // Predicated region
    $region54: #{custom_cnn_forward.1} parent=1 // pred_check
      _
    $region55: #{custom_cnn_forward.1} parent=1 // pred_check_branch
      %160 = sbr.rel (0) target = $region57
    $region56: #{custom_cnn_forward.1} parent=1 // pred_region
      _
    $region57: #{custom_cnn_forward.1} parent=1 // pred_fallthru
      _
    // Predicated region
    $region58: #{custom_cnn_forward.1} parent=1 // pred_check
      _
    $region59: #{custom_cnn_forward.1} parent=1 // pred_check_branch
      %162 = sbr.rel (0) target = $region61
    $region60: #{custom_cnn_forward.1} parent=1 // pred_region
      _
    $region61: #{custom_cnn_forward.1} parent=1 // pred_fallthru
      _
    // Predicated region
    $region62: #{custom_cnn_forward.1} parent=1 // pred_check
      _
    $region63: #{custom_cnn_forward.1} parent=1 // pred_check_branch
      %164 = sbr.rel (0) target = $region65
    $region64: #{custom_cnn_forward.1} parent=1 // pred_region
      _
    $region65: #{custom_cnn_forward.1} parent=1 // pred_fallthru
      _
    // Predicated region
    $region66: #{custom_cnn_forward.1} parent=1 // pred_check
      _
    $region67: #{custom_cnn_forward.1} parent=1 // pred_check_branch
      %166 = sbr.rel (0) target = $region69
    $region68: #{custom_cnn_forward.1} parent=1 // pred_region
      %s168 = ssub.s32 2048, 2048
      %169 = vsyncadd [#allocation18], %s168
      %s170 = sshll.u32 [#allocation19], 4
      %s171 = int_to_ptr.vmem [resolvable:$true] %s170
      %176 = dma.hbm_to_vmem [thread:$0]  %s16, 2048, %s171, [#allocation18], 128, 128, 8
    $region69: #{custom_cnn_forward.1} parent=1 // pred_fallthru
      _
    // Predicated region
    $region70: #{custom_cnn_forward.1} parent=1 // pred_check
      _
    $region71: #{custom_cnn_forward.1} parent=1 // pred_check_branch
      %178 = sbr.rel (0) target = $region73
    $region72: #{custom_cnn_forward.1} parent=1 // pred_region
      _
    $region73: #{custom_cnn_forward.1} parent=1 // pred_fallthru
      _
    // Predicated region
    $region74: #{custom_cnn_forward.1} parent=1 // pred_check
      _
    $region75: #{custom_cnn_forward.1} parent=1 // pred_check_branch
      %180 = sbr.rel (0) target = $region77
    $region76: #{custom_cnn_forward.1} parent=1 // pred_region
      %s182 = ssub.s32 32, 32
      %183 = vsyncadd [#allocation21], %s182
      %s185 = sshll.u32 [#allocation20], 4
      %s186 = int_to_ptr.vmem [resolvable:$true] %s185
      %188 = dma.hbm_to_vmem [thread:$0]  %s18, 32, %s186, [#allocation21]
    $region77: #{custom_cnn_forward.1} parent=1 // pred_fallthru
      _
    // Predicated region
    $region78: #{custom_cnn_forward.1} parent=1 // pred_check
      _
    $region79: #{custom_cnn_forward.1} parent=1 // pred_check_branch
      %190 = sbr.rel (0) target = $region81
    $region80: #{custom_cnn_forward.1} parent=1 // pred_region
      %s192 = ssub.s32 2048, 2048
      %193 = vsyncadd [#allocation21], %s192
      %s194 = sshll.u32 [#allocation22], 4
      %s195 = int_to_ptr.vmem [resolvable:$true] %s194
      %200 = dma.hbm_to_vmem [thread:$0]  %s19, 2048, %s195, [#allocation21], 64, 64, 4
    $region81: #{custom_cnn_forward.1} parent=1 // pred_fallthru
      _
    // Predicated region
    $region82: #{custom_cnn_forward.1} parent=1 // pred_check
      _
    $region83: #{custom_cnn_forward.1} parent=1 // pred_check_branch
      %202 = sbr.rel (0) target = $region85
    $region84: #{custom_cnn_forward.1} parent=1 // pred_region
      %s204 = ssub.s32 2048, 2048
      %205 = vsyncadd [#allocation24], %s204
      %s206 = sshll.u32 [#allocation23], 4
      %s207 = int_to_ptr.vmem [resolvable:$true] %s206
      %212 = dma.hbm_to_vmem [thread:$0]  %s20, 2048, %s207, [#allocation24], 64, 64, 4
    $region85: #{custom_cnn_forward.1} parent=1 // pred_fallthru
      _
    // Predicated region
    $region86: #{custom_cnn_forward.1} parent=1 // pred_check
      _
    $region87: #{custom_cnn_forward.1} parent=1 // pred_check_branch
      %214 = sbr.rel (0) target = $region89
    $region88: #{custom_cnn_forward.1} parent=1 // pred_region
      %s216 = ssub.s32 16, 16
      %217 = vsyncadd [#allocation24], %s216
      %s219 = sshll.u32 [#allocation25], 4
      %s220 = int_to_ptr.vmem [resolvable:$true] %s219
      %222 = dma.hbm_to_vmem [thread:$0]  %s21, 16, %s220, [#allocation24]
    $region89: #{custom_cnn_forward.1} parent=1 // pred_fallthru
      _
    // Predicated region
    $region90: #{custom_cnn_forward.1} parent=1 // pred_check
      _
    $region91: #{custom_cnn_forward.1} parent=1 // pred_check_branch
      %224 = sbr.rel (0) target = $region93
    $region92: #{custom_cnn_forward.1} parent=1 // pred_region
      %s226 = ssub.s32 16, 16
      %227 = vsyncadd [#allocation27], %s226
      %s229 = sshll.u32 [#allocation26], 4
      %s230 = int_to_ptr.vmem [resolvable:$true] %s229
      %232 = dma.hbm_to_vmem [thread:$0]  %s22, 16, %s230, [#allocation27]
    $region93: #{custom_cnn_forward.1} parent=1 // pred_fallthru
      _
    // Predicated region
    $region94: #{custom_cnn_forward.1} parent=1 // pred_check
      _
    $region95: #{custom_cnn_forward.1} parent=1 // pred_check_branch
      %234 = sbr.rel (0) target = $region97
    $region96: #{custom_cnn_forward.1} parent=1 // pred_region
      %s236 = ssub.s32 16, 16
      %237 = vsyncadd [#allocation27], %s236
      %s239 = sshll.u32 [#allocation28], 4
      %s240 = int_to_ptr.vmem [resolvable:$true] %s239
      %242 = dma.hbm_to_vmem [thread:$0]  %s23, 16, %s240, [#allocation27]
    $region97: #{custom_cnn_forward.1} parent=1 // pred_fallthru
      _
    // Predicated region
    $region98: #{custom_cnn_forward.1} parent=1 // pred_check
      _
    $region99: #{custom_cnn_forward.1} parent=1 // pred_check_branch
      %244 = sbr.rel (0) target = $region101
    $region100: #{custom_cnn_forward.1} parent=1 // pred_region
      _
    $region101: #{custom_cnn_forward.1} parent=1 // pred_fallthru
      _
    // Predicated region
    $region102: #{custom_cnn_forward.1} parent=1 // pred_check
      _
    $region103: #{custom_cnn_forward.1} parent=1 // pred_check_branch
      %246 = sbr.rel (0) target = $region105
    $region104: #{custom_cnn_forward.1} parent=1 // pred_region
      %247 = dma.done [#allocation4], 256
    $region105: #{custom_cnn_forward.1} parent=1 // pred_fallthru
      _
    // Predicated region
    $region106: #{custom_cnn_forward.1} parent=1 // pred_check
      _
    $region107: #{custom_cnn_forward.1} parent=1 // pred_check_branch
      %249 = sbr.rel (0) target = $region109
    $region108: #{custom_cnn_forward.1} parent=1 // pred_region
      %250 = dma.done [#allocation6], 256
    $region109: #{custom_cnn_forward.1} parent=1 // pred_fallthru
      _
    // Predicated region
    $region110: #{custom_cnn_forward.1} parent=1 // pred_check
      _
    $region111: #{custom_cnn_forward.1} parent=1 // pred_check_branch
      %252 = sbr.rel (0) target = $region113
    $region112: #{custom_cnn_forward.1} parent=1 // pred_region
      %253 = dma.done [#allocation6], 256
    $region113: #{custom_cnn_forward.1} parent=1 // pred_fallthru
      _
    // Predicated region
    $region114: #{custom_cnn_forward.1} parent=1 // pred_check
      _
    $region115: #{custom_cnn_forward.1} parent=1 // pred_check_branch
      %255 = sbr.rel (0) target = $region117
    $region116: #{custom_cnn_forward.1} parent=1 // pred_region
      %256 = dma.done [#allocation9], 16
    $region117: #{custom_cnn_forward.1} parent=1 // pred_fallthru
      _
    // Predicated region
    $region118: #{custom_cnn_forward.1} parent=1 // pred_check
      _
    $region119: #{custom_cnn_forward.1} parent=1 // pred_check_branch
      %258 = sbr.rel (0) target = $region121
    $region120: #{custom_cnn_forward.1} parent=1 // pred_region
      %259 = dma.done [#allocation9], 16
    $region121: #{custom_cnn_forward.1} parent=1 // pred_fallthru
      _
    // Predicated region
    $region122: #{custom_cnn_forward.1} parent=1 // pred_check
      _
    $region123: #{custom_cnn_forward.1} parent=1 // pred_check_branch
      %261 = sbr.rel (0) target = $region125
    $region124: #{custom_cnn_forward.1} parent=1 // pred_region
      %262 = dma.done [#allocation12], 1024
    $region125: #{custom_cnn_forward.1} parent=1 // pred_fallthru
      _
    // Predicated region
    $region126: #{custom_cnn_forward.1} parent=1 // pred_check
      _
    $region127: #{custom_cnn_forward.1} parent=1 // pred_check_branch
      %264 = sbr.rel (0) target = $region129
    $region128: #{custom_cnn_forward.1} parent=1 // pred_region
      %265 = dma.done [#allocation12], 1024
    $region129: #{custom_cnn_forward.1} parent=1 // pred_fallthru
      _
    // Predicated region
    $region130: #{custom_cnn_forward.1} parent=1 // pred_check
      _
    $region131: #{custom_cnn_forward.1} parent=1 // pred_check_branch
      %267 = sbr.rel (0) target = $region133
    $region132: #{custom_cnn_forward.1} parent=1 // pred_region
      %268 = dma.done [#allocation15], 16
    $region133: #{custom_cnn_forward.1} parent=1 // pred_fallthru
      _
    // Predicated region
    $region134: #{custom_cnn_forward.1} parent=1 // pred_check
      _
    $region135: #{custom_cnn_forward.1} parent=1 // pred_check_branch
      %270 = sbr.rel (0) target = $region137
    $region136: #{custom_cnn_forward.1} parent=1 // pred_region
      %271 = dma.done [#allocation15], 16
    $region137: #{custom_cnn_forward.1} parent=1 // pred_fallthru
      _
    // Predicated region
    $region138: #{custom_cnn_forward.1} parent=1 // pred_check
      _
    $region139: #{custom_cnn_forward.1} parent=1 // pred_check_branch
      %273 = sbr.rel (0) target = $region141
    $region140: #{custom_cnn_forward.1} parent=1 // pred_region
      %274 = dma.done [#allocation18], 1024
    $region141: #{custom_cnn_forward.1} parent=1 // pred_fallthru
      _
    // Predicated region
    $region142: #{custom_cnn_forward.1} parent=1 // pred_check
      _
    $region143: #{custom_cnn_forward.1} parent=1 // pred_check_branch
      %276 = sbr.rel (0) target = $region145
    $region144: #{custom_cnn_forward.1} parent=1 // pred_region
      %277 = dma.done [#allocation18], 2048
    $region145: #{custom_cnn_forward.1} parent=1 // pred_fallthru
      _
    // Predicated region
    $region146: #{custom_cnn_forward.1} parent=1 // pred_check
      _
    $region147: #{custom_cnn_forward.1} parent=1 // pred_check_branch
      %279 = sbr.rel (0) target = $region149
    $region148: #{custom_cnn_forward.1} parent=1 // pred_region
      %280 = dma.done [#allocation21], 32
    $region149: #{custom_cnn_forward.1} parent=1 // pred_fallthru
      _
    // Predicated region
    $region150: #{custom_cnn_forward.1} parent=1 // pred_check
      _
    $region151: #{custom_cnn_forward.1} parent=1 // pred_check_branch
      %282 = sbr.rel (0) target = $region153
    $region152: #{custom_cnn_forward.1} parent=1 // pred_region
      %283 = dma.done [#allocation21], 2048
    $region153: #{custom_cnn_forward.1} parent=1 // pred_fallthru
      _
    // Predicated region
    $region154: #{custom_cnn_forward.1} parent=1 // pred_check
      _
    $region155: #{custom_cnn_forward.1} parent=1 // pred_check_branch
      %285 = sbr.rel (0) target = $region157
    $region156: #{custom_cnn_forward.1} parent=1 // pred_region
      %286 = dma.done [#allocation24], 2048
    $region157: #{custom_cnn_forward.1} parent=1 // pred_fallthru
      _
    // Predicated region
    $region158: #{custom_cnn_forward.1} parent=1 // pred_check
      _
    $region159: #{custom_cnn_forward.1} parent=1 // pred_check_branch
      %288 = sbr.rel (0) target = $region161
    $region160: #{custom_cnn_forward.1} parent=1 // pred_region
      %289 = dma.done [#allocation24], 16
    $region161: #{custom_cnn_forward.1} parent=1 // pred_fallthru
      _
    // Predicated region
    $region162: #{custom_cnn_forward.1} parent=1 // pred_check
      _
    $region163: #{custom_cnn_forward.1} parent=1 // pred_check_branch
      %291 = sbr.rel (0) target = $region165
    $region164: #{custom_cnn_forward.1} parent=1 // pred_region
      %292 = dma.done [#allocation27], 16
    $region165: #{custom_cnn_forward.1} parent=1 // pred_fallthru
      _
    // Predicated region
    $region166: #{custom_cnn_forward.1} parent=1 // pred_check
      _
    $region167: #{custom_cnn_forward.1} parent=1 // pred_check_branch
      %294 = sbr.rel (0) target = $region169
    $region168: #{custom_cnn_forward.1} parent=1 // pred_region
      %295 = dma.done [#allocation27], 16
    $region169: #{custom_cnn_forward.1} parent=1 // pred_fallthru
      _
    %v297 = vlaneseq
    %v298 = vshrl.u32 %v297, 7
    %v299 = vadd.s32 %v298, 8
    %v300 = vadd.s32 %v298, 16
    %v301 = vadd.s32 %v298, 24
    %vm302 = vcmp.lt.s32.totalorder %v298, 0
    %v303 = vsub.s32 0, %v298
    %v304 = vsel %vm302, %v303, %v298
    %v305 = vshrl.u32 %v304, 4
    %v306 = vand.u32 %v304, 15
    %v307 = vsub.s32 0, %v306
    %v308 = vsel %vm302, %v307, %v306
    %vm309 = vcmp.lt.s32.totalorder %v299, 0
    %v310 = vsub.s32 0, %v299
    %v311 = vsel %vm309, %v310, %v299
    %v312 = vshrl.u32 %v311, 4
    %v313 = vand.u32 %v311, 15
    %v314 = vsub.s32 0, %v313
    %v315 = vsel %vm309, %v314, %v313
    %vm316 = vcmp.lt.s32.totalorder %v300, 0
    %v317 = vsub.s32 0, %v300
    %v318 = vsel %vm316, %v317, %v300
    %v319 = vshrl.u32 %v318, 4
    %v320 = vand.u32 %v318, 15
    %v321 = vsub.s32 0, %v320
    %v322 = vsel %vm316, %v321, %v320
    %vm323 = vcmp.lt.s32.totalorder %v301, 0
    %v324 = vsub.s32 0, %v301
    %v325 = vsel %vm323, %v324, %v301
    %v326 = vshrl.u32 %v325, 4
    %v327 = vand.u32 %v325, 15
    %v328 = vsub.s32 0, %v327
    %v329 = vsel %vm323, %v328, %v327
    %vm330 = vcmp.ne.s32.totalorder %v308, 0
    %vm331 = vcmp.ne.s32.totalorder %v315, 0
    %vm332 = vcmp.ne.s32.totalorder %v322, 0
    %vm333 = vcmp.ne.s32.totalorder %v329, 0
    %vm334 = vcmp.lt.s32.totalorder %v308, 0
    %vm335 = vcmp.lt.s32.totalorder %v315, 0
    %vm336 = vcmp.lt.s32.totalorder %v322, 0
    %vm337 = vcmp.lt.s32.totalorder %v329, 0
    %vm338 = vmand %vm334, %vm330
    %vm339 = vmand %vm335, %vm331
    %vm340 = vmand %vm336, %vm332
    %vm341 = vmand %vm337, %vm333
    %v342 = vadd.s32 %v308, 16
    %v343 = vadd.s32 %v315, 16
    %v344 = vadd.s32 %v322, 16
    %v345 = vadd.s32 %v329, 16
    %v346 = vsel %vm338, %v342, %v308
    %v347 = vsel %vm339, %v343, %v315
    %v348 = vsel %vm340, %v344, %v322
    %v349 = vsel %vm341, %v345, %v329
    %vm350 = vcmp.ne.s32.totalorder %v346, 0
    %vm351 = vcmp.ne.s32.totalorder %v347, 0
    %vm352 = vcmp.ne.s32.totalorder %v348, 0
    %vm353 = vcmp.ne.s32.totalorder %v349, 0
    %vm354 = vcmp.ne.s32.totalorder %v346, 15
    %vm355 = vcmp.ne.s32.totalorder %v347, 15
    %vm356 = vcmp.ne.s32.totalorder %v348, 15
    %vm357 = vcmp.ne.s32.totalorder %v349, 15
    %v358 = vld [vmem:[%s0] sm:$0xff]
    %v359 = vld [vmem:[%s0 + $0x8] sm:$0xff]
    %v360 = vld [vmem:[%s0 + $0x10] sm:$0xff]
    %v361 = vld [vmem:[%s0 + $0x18] sm:$0xff]
    %v362 = vrot.slane %v358, 7
    %v363 = vrot.slane %v359, 7
    %v364 = vrot.slane %v360, 7
    %v365 = vrot.slane %v361, 7
    %vm366 = vcmp.lt.s32.totalorder %v298, 1
    %v367 = vsel %vm366, %v364, %v365
    %v368 = vsel %vm366, %v363, %v364
    %v369 = vsel %vm366, %v362, %v363
    %v370 = vsel %vm366, %v365, %v362
    %v371 = vsel %vm350, 1, 0
    %v372 = vsel %vm351, 1, 0
    %v373 = vsel %vm352, 1, 0
    %v374 = vsel %vm353, 1, 0
    %vm375 = vcmp.eq.s32.totalorder %v371, 1
    %vm376 = vcmp.eq.s32.totalorder %v372, 1
    %vm377 = vcmp.eq.s32.totalorder %v373, 1
    %vm378 = vcmp.eq.s32.totalorder %v374, 1
    %v379 = vsel %vm375, %v370, 0.0
    %v380 = vsel %vm376, %v369, 0.0
    %v381 = vsel %vm377, %v368, 0.0
    %v382 = vsel %vm378, %v367, 0.0
    %v383 = vpack.c.bf16 %v380, %v379
    %v384 = vpack.c.bf16 %v382, %v381
    %v385 = vld [vmem:[#allocation3] sm:$0xf]
    %v386 = vld [vmem:[#allocation3 + $0x4] sm:$0xf]
    %v387 = vld [vmem:[#allocation3 + $0x8] sm:$0xf]
    %v388 = vld [vmem:[#allocation3 + $0xc] sm:$0xf]
    %v389 = vpack.c.bf16 %v359, %v358
    %v390 = vpack.c.bf16 %v361, %v360
    %v391 = vld [vmem:[#allocation5] sm:$0xf]
    %v392 = vld [vmem:[#allocation5 + $0x4] sm:$0xf]
    %v393 = vld [vmem:[#allocation5 + $0x8] sm:$0xf]
    %v394 = vld [vmem:[#allocation5 + $0xc] sm:$0xf]
    %v399 = vunpack.c.l.b16 %v391
    %v400 = vunpack.c.l.b16 %v392
    %v401 = vunpack.c.l.b16 %v393
    %v402 = vunpack.c.l.b16 %v394
    %v403 = vpack.c.b16 %v400, %v399
    %v404 = vpack.c.b16 %v402, %v401
    %vm407 = vcmask 261120
    %v409 = vsel %vm407, %v389, 0
    %v412 = vsel %vm407, %v390, 0
    %414 = vmatprep.subr.bf16.mxu0 0
    %415 = vmatpush1.bf16.msra.mxu0 0
    %416 = vmatprep.subr.bf16.mxu0 0
    %417 = vmatpush1.bf16.msra.mxu0 0
    %418 = vmatprep.subr.bf16.mxu0 0
    %419 = vmatpush1.bf16.msra.mxu0 0
    %420 = vmatprep.subr.bf16.mxu0 0
    %421 = vmatpush1.bf16.msra.mxu0 0
    %422 = vmatprep.subr.bf16.mxu0 0
    %423 = vmatpush1.bf16.msra.mxu0 0
    %424 = vmatprep.subr.bf16.mxu0 0
    %425 = vmatpush1.bf16.msra.mxu0 0
    %426 = vmatprep.subr.bf16.mxu0 0
    %427 = vmatpush1.bf16.msra.mxu0 %v404
    %428 = vmatprep.subr.bf16.mxu0 0
    %429 = vmatpush1.bf16.msra.mxu0 %v403
    %430 = vmatprep.subr.bf16.mxu0 0
    %431 = vmatpush2.bf16.msra.mxu0 0
    %432 = vmatprep.subr.bf16.mxu0 0
    %433 = vmatpush2.bf16.msra.mxu0 0
    %434 = vmatprep.subr.bf16.mxu0 0
    %435 = vmatpush2.bf16.msra.mxu0 0
    %436 = vmatprep.subr.bf16.mxu0 0
    %437 = vmatpush2.bf16.msra.mxu0 0
    %438 = vmatprep.subr.bf16.mxu0 0
    %439 = vmatpush2.bf16.msra.mxu0 0
    %440 = vmatprep.subr.bf16.mxu0 0
    %441 = vmatpush2.bf16.msra.mxu0 0
    %442 = vmatprep.subr.bf16.mxu0 0
    %443 = vmatpush2.bf16.msra.mxu0 0
    %444 = vmatprep.subr.bf16.mxu0 0
    %445 = vmatpush2.bf16.msra.mxu0 0
    %446 = vmatprep.mubr.bf16.mxu0 0
    %447 = vmatmul.mubr.bf16.gmra.mxu0 %v409
    %v448 = vpop.f32.mrf.mxu0
    %v449 = vadd.f32 0.0, %v448
    %v450 = vpop.f32.mrf.mxu0
    %v451 = vpop.f32.mrf.mxu0
    %v452 = vadd.f32 0.0, %v451
    %v453 = vpop.f32.mrf.mxu0
    %454 = vmatprep.mubr.bf16.mxu0 0
    %455 = vmatmul.mubr.bf16.gmra.mxu0 %v412
    %v456 = vpop.f32.mrf.mxu0
    %v457 = vadd.f32 0.0, %v456
    %v458 = vpop.f32.mrf.mxu0
    %v459 = vpop.f32.mrf.mxu0
    %v460 = vadd.f32 0.0, %v459
    %v461 = vpop.f32.mrf.mxu0
    %462 = vdwg.mxu0
    %v467 = vunpack.c.l.b16 %v385
    %v468 = vunpack.c.l.b16 %v386
    %v469 = vunpack.c.l.b16 %v387
    %v470 = vunpack.c.l.b16 %v388
    %v471 = vpack.c.b16 %v468, %v467
    %v472 = vpack.c.b16 %v470, %v469
    %v476 = vsel %vm407, %v383, 0
    %v479 = vsel %vm407, %v384, 0
    %481 = vmatprep.subr.bf16.mxu0 0
    %482 = vmatpush1.bf16.msra.mxu0 0
    %483 = vmatprep.subr.bf16.mxu0 0
    %484 = vmatpush1.bf16.msra.mxu0 0
    %485 = vmatprep.subr.bf16.mxu0 0
    %486 = vmatpush1.bf16.msra.mxu0 0
    %487 = vmatprep.subr.bf16.mxu0 0
    %488 = vmatpush1.bf16.msra.mxu0 0
    %489 = vmatprep.subr.bf16.mxu0 0
    %490 = vmatpush1.bf16.msra.mxu0 0
    %491 = vmatprep.subr.bf16.mxu0 0
    %492 = vmatpush1.bf16.msra.mxu0 0
    %493 = vmatprep.subr.bf16.mxu0 0
    %494 = vmatpush1.bf16.msra.mxu0 %v472
    %495 = vmatprep.subr.bf16.mxu0 0
    %496 = vmatpush1.bf16.msra.mxu0 %v471
    %497 = vmatprep.subr.bf16.mxu0 0
    %498 = vmatpush2.bf16.msra.mxu0 0
    %499 = vmatprep.subr.bf16.mxu0 0
    %500 = vmatpush2.bf16.msra.mxu0 0
    %501 = vmatprep.subr.bf16.mxu0 0
    %502 = vmatpush2.bf16.msra.mxu0 0
    %503 = vmatprep.subr.bf16.mxu0 0
    %504 = vmatpush2.bf16.msra.mxu0 0
    %505 = vmatprep.subr.bf16.mxu0 0
    %506 = vmatpush2.bf16.msra.mxu0 0
    %507 = vmatprep.subr.bf16.mxu0 0
    %508 = vmatpush2.bf16.msra.mxu0 0
    %509 = vmatprep.subr.bf16.mxu0 0
    %510 = vmatpush2.bf16.msra.mxu0 0
    %511 = vmatprep.subr.bf16.mxu0 0
    %512 = vmatpush2.bf16.msra.mxu0 0
    %513 = vmatprep.mubr.bf16.mxu0 0
    %514 = vmatmul.mubr.bf16.gmra.mxu0 %v476
    %v515 = vpop.f32.mrf.mxu0
    %v516 = vadd.f32 %v449, %v515
    %v517 = vpop.f32.mrf.mxu0
    %v518 = vpop.f32.mrf.mxu0
    %v519 = vadd.f32 %v452, %v518
    %v520 = vpop.f32.mrf.mxu0
    %521 = vmatprep.mubr.bf16.mxu0 0
    %522 = vmatmul.mubr.bf16.gmra.mxu0 %v479
    %v523 = vpop.f32.mrf.mxu0
    %v524 = vadd.f32 %v457, %v523
    %v525 = vpop.f32.mrf.mxu0
    %v526 = vpop.f32.mrf.mxu0
    %v527 = vadd.f32 %v460, %v526
    %v528 = vpop.f32.mrf.mxu0
    %529 = vdwg.mxu0
    %v530 = vrot.slane %v358, 1
    %v531 = vrot.slane %v359, 1
    %v532 = vrot.slane %v360, 1
    %v533 = vrot.slane %v361, 1
    %vm534 = vcmp.lt.s32.totalorder %v298, 7
    %v535 = vsel %vm534, %v532, %v533
    %v536 = vsel %vm534, %v531, %v532
    %v537 = vsel %vm534, %v530, %v531
    %v538 = vsel %vm534, %v533, %v530
    %v539 = vsel %vm354, 1, 0
    %v540 = vsel %vm355, 1, 0
    %v541 = vsel %vm356, 1, 0
    %v542 = vsel %vm357, 1, 0
    %vm543 = vcmp.eq.s32.totalorder %v539, 1
    %vm544 = vcmp.eq.s32.totalorder %v540, 1
    %vm545 = vcmp.eq.s32.totalorder %v541, 1
    %vm546 = vcmp.eq.s32.totalorder %v542, 1
    %v547 = vsel %vm543, %v537, 0.0
    %v548 = vsel %vm544, %v536, 0.0
    %v549 = vsel %vm545, %v535, 0.0
    %v550 = vsel %vm546, %v538, 0.0
    %v551 = vpack.c.bf16 %v548, %v547
    %v552 = vpack.c.bf16 %v550, %v549
    %v553 = vld [vmem:[#allocation7] sm:$0xf]
    %v554 = vld [vmem:[#allocation7 + $0x4] sm:$0xf]
    %v555 = vld [vmem:[#allocation7 + $0x8] sm:$0xf]
    %v556 = vld [vmem:[#allocation7 + $0xc] sm:$0xf]
    %v561 = vunpack.c.l.b16 %v553
    %v562 = vunpack.c.l.b16 %v554
    %v563 = vunpack.c.l.b16 %v555
    %v564 = vunpack.c.l.b16 %v556
    %v565 = vpack.c.b16 %v562, %v561
    %v566 = vpack.c.b16 %v564, %v563
    %v570 = vsel %vm407, %v551, 0
    %v573 = vsel %vm407, %v552, 0
    %575 = vmatprep.subr.bf16.mxu0 0
    %576 = vmatpush1.bf16.msra.mxu0 0
    %577 = vmatprep.subr.bf16.mxu0 0
    %578 = vmatpush1.bf16.msra.mxu0 0
    %579 = vmatprep.subr.bf16.mxu0 0
    %580 = vmatpush1.bf16.msra.mxu0 0
    %581 = vmatprep.subr.bf16.mxu0 0
    %582 = vmatpush1.bf16.msra.mxu0 0
    %583 = vmatprep.subr.bf16.mxu0 0
    %584 = vmatpush1.bf16.msra.mxu0 0
    %585 = vmatprep.subr.bf16.mxu0 0
    %586 = vmatpush1.bf16.msra.mxu0 0
    %587 = vmatprep.subr.bf16.mxu0 0
    %588 = vmatpush1.bf16.msra.mxu0 %v566
    %589 = vmatprep.subr.bf16.mxu0 0
    %590 = vmatpush1.bf16.msra.mxu0 %v565
    %591 = vmatprep.subr.bf16.mxu0 0
    %592 = vmatpush2.bf16.msra.mxu0 0
    %593 = vmatprep.subr.bf16.mxu0 0
    %594 = vmatpush2.bf16.msra.mxu0 0
    %595 = vmatprep.subr.bf16.mxu0 0
    %596 = vmatpush2.bf16.msra.mxu0 0
    %597 = vmatprep.subr.bf16.mxu0 0
    %598 = vmatpush2.bf16.msra.mxu0 0
    %599 = vmatprep.subr.bf16.mxu0 0
    %600 = vmatpush2.bf16.msra.mxu0 0
    %601 = vmatprep.subr.bf16.mxu0 0
    %602 = vmatpush2.bf16.msra.mxu0 0
    %603 = vmatprep.subr.bf16.mxu0 0
    %604 = vmatpush2.bf16.msra.mxu0 0
    %605 = vmatprep.subr.bf16.mxu0 0
    %606 = vmatpush2.bf16.msra.mxu0 0
    %607 = vmatprep.mubr.bf16.mxu0 0
    %608 = vmatmul.mubr.bf16.gmra.mxu0 %v570
    %v609 = vpop.f32.mrf.mxu0
    %v610 = vadd.f32 0.0, %v609
    %v611 = vpop.f32.mrf.mxu0
    %v612 = vpop.f32.mrf.mxu0
    %v613 = vadd.f32 0.0, %v612
    %v614 = vpop.f32.mrf.mxu0
    %615 = vmatprep.mubr.bf16.mxu0 0
    %616 = vmatmul.mubr.bf16.gmra.mxu0 %v573
    %v617 = vpop.f32.mrf.mxu0
    %v618 = vadd.f32 0.0, %v617
    %v619 = vpop.f32.mrf.mxu0
    %v620 = vpop.f32.mrf.mxu0
    %v621 = vadd.f32 0.0, %v620
    %v622 = vpop.f32.mrf.mxu0
    %623 = vdwg.mxu0
    %v624 = vadd.f32 %v516, %v610
    %v625 = vadd.f32 %v519, %v613
    %v626 = vadd.f32 %v524, %v618
    %v627 = vadd.f32 %v527, %v621
    %v628 = vld [vmem:[#allocation8] sm:$0x1]
    %v630 = vlaneseq
    %v631 = vshrl.u32 %v630, 7
    %v632 = vsub.s32 0, %v631
    %v633 = vrot.slane %v628, %v632
    %v635 = vmul.f32 %v624, %v633
    %v636 = vmul.f32 %v625, %v633
    %v637 = vmul.f32 %v626, %v633
    %v638 = vmul.f32 %v627, %v633
    %v639 = vld [vmem:[#allocation10] sm:$0x1]
    %v641 = vlaneseq
    %v642 = vshrl.u32 %v641, 7
    %v643 = vsub.s32 0, %v642
    %v644 = vrot.slane %v639, %v643
    %v646 = vadd.f32 %v635, %v644
    %v647 = vadd.f32 %v636, %v644
    %v648 = vadd.f32 %v637, %v644
    %v649 = vadd.f32 %v638, %v644
    %v650 = vmax.f32 %v646, 0.0
    %v651 = vmax.f32 %v647, 0.0
    %v652 = vmax.f32 %v648, 0.0
    %v653 = vmax.f32 %v649, 0.0
    %v654 = vrot.slane %v650, 7
    %v655 = vrot.slane %v651, 7
    %v656 = vrot.slane %v652, 7
    %v657 = vrot.slane %v653, 7
    %v658 = vsel %vm366, %v656, %v657
    %v659 = vsel %vm366, %v655, %v656
    %v660 = vsel %vm366, %v654, %v655
    %v661 = vsel %vm366, %v657, %v654
    %v662 = vsel %vm375, %v661, 0.0
    %v663 = vsel %vm376, %v660, 0.0
    %v664 = vsel %vm377, %v659, 0.0
    %v665 = vsel %vm378, %v658, 0.0
    %v666 = vpack.c.bf16 %v663, %v662
    %v667 = vpack.c.bf16 %v665, %v664
    %v668 = vld [vmem:[#allocation11] sm:$0xf]
    %v669 = vld [vmem:[#allocation11 + $0x4] sm:$0xf]
    %v670 = vld [vmem:[#allocation11 + $0x8] sm:$0xf]
    %v671 = vld [vmem:[#allocation11 + $0xc] sm:$0xf]
    %v672 = vld [vmem:[#allocation11 + $0x10] sm:$0xf]
    %v673 = vld [vmem:[#allocation11 + $0x14] sm:$0xf]
    %v674 = vld [vmem:[#allocation11 + $0x18] sm:$0xf]
    %v675 = vld [vmem:[#allocation11 + $0x1c] sm:$0xf]
    %v676 = vld [vmem:[#allocation11 + $0x20] sm:$0xf]
    %v677 = vld [vmem:[#allocation11 + $0x24] sm:$0xf]
    %v678 = vld [vmem:[#allocation11 + $0x28] sm:$0xf]
    %v679 = vld [vmem:[#allocation11 + $0x2c] sm:$0xf]
    %v680 = vld [vmem:[#allocation11 + $0x30] sm:$0xf]
    %v681 = vld [vmem:[#allocation11 + $0x34] sm:$0xf]
    %v682 = vld [vmem:[#allocation11 + $0x38] sm:$0xf]
    %v683 = vld [vmem:[#allocation11 + $0x3c] sm:$0xf]
    %v684 = vpack.c.bf16 %v651, %v650
    %v685 = vpack.c.bf16 %v653, %v652
    %v686 = vld [vmem:[#allocation13] sm:$0xf]
    %v687 = vld [vmem:[#allocation13 + $0x4] sm:$0xf]
    %v688 = vld [vmem:[#allocation13 + $0x8] sm:$0xf]
    %v689 = vld [vmem:[#allocation13 + $0xc] sm:$0xf]
    %v690 = vld [vmem:[#allocation13 + $0x10] sm:$0xf]
    %v691 = vld [vmem:[#allocation13 + $0x14] sm:$0xf]
    %v692 = vld [vmem:[#allocation13 + $0x18] sm:$0xf]
    %v693 = vld [vmem:[#allocation13 + $0x1c] sm:$0xf]
    %v694 = vld [vmem:[#allocation13 + $0x20] sm:$0xf]
    %v695 = vld [vmem:[#allocation13 + $0x24] sm:$0xf]
    %v696 = vld [vmem:[#allocation13 + $0x28] sm:$0xf]
    %v697 = vld [vmem:[#allocation13 + $0x2c] sm:$0xf]
    %v698 = vld [vmem:[#allocation13 + $0x30] sm:$0xf]
    %v699 = vld [vmem:[#allocation13 + $0x34] sm:$0xf]
    %v700 = vld [vmem:[#allocation13 + $0x38] sm:$0xf]
    %v701 = vld [vmem:[#allocation13 + $0x3c] sm:$0xf]
    %v718 = vunpack.c.l.b16 %v686
    %v719 = vunpack.c.l.b16 %v687
    %v720 = vunpack.c.l.b16 %v688
    %v721 = vunpack.c.l.b16 %v689
    %v722 = vunpack.c.l.b16 %v690
    %v723 = vunpack.c.l.b16 %v691
    %v724 = vunpack.c.l.b16 %v692
    %v725 = vunpack.c.l.b16 %v693
    %v726 = vunpack.c.l.b16 %v694
    %v727 = vunpack.c.l.b16 %v695
    %v728 = vunpack.c.l.b16 %v696
    %v729 = vunpack.c.l.b16 %v697
    %v730 = vunpack.c.l.b16 %v698
    %v731 = vunpack.c.l.b16 %v699
    %v732 = vunpack.c.l.b16 %v700
    %v733 = vunpack.c.l.b16 %v701
    %v734 = vpack.c.b16 %v719, %v718
    %v735 = vpack.c.b16 %v721, %v720
    %v736 = vpack.c.b16 %v723, %v722
    %v737 = vpack.c.b16 %v725, %v724
    %v738 = vpack.c.b16 %v727, %v726
    %v739 = vpack.c.b16 %v729, %v728
    %v740 = vpack.c.b16 %v731, %v730
    %v741 = vpack.c.b16 %v733, %v732
    %750 = vmatprep.subr.bf16.mxu0 0
    %751 = vmatpush1.bf16.msra.mxu0 %v741
    %752 = vmatprep.subr.bf16.mxu0 0
    %753 = vmatpush1.bf16.msra.mxu0 %v740
    %754 = vmatprep.subr.bf16.mxu0 0
    %755 = vmatpush1.bf16.msra.mxu0 %v739
    %756 = vmatprep.subr.bf16.mxu0 0
    %757 = vmatpush1.bf16.msra.mxu0 %v738
    %758 = vmatprep.subr.bf16.mxu0 0
    %759 = vmatpush1.bf16.msra.mxu0 %v737
    %760 = vmatprep.subr.bf16.mxu0 0
    %761 = vmatpush1.bf16.msra.mxu0 %v736
    %762 = vmatprep.subr.bf16.mxu0 0
    %763 = vmatpush1.bf16.msra.mxu0 %v735
    %764 = vmatprep.subr.bf16.mxu0 0
    %765 = vmatpush1.bf16.msra.mxu0 %v734
    %766 = vmatprep.subr.bf16.mxu0 0
    %767 = vmatpush2.bf16.msra.mxu0 0
    %768 = vmatprep.subr.bf16.mxu0 0
    %769 = vmatpush2.bf16.msra.mxu0 0
    %770 = vmatprep.subr.bf16.mxu0 0
    %771 = vmatpush2.bf16.msra.mxu0 0
    %772 = vmatprep.subr.bf16.mxu0 0
    %773 = vmatpush2.bf16.msra.mxu0 0
    %774 = vmatprep.subr.bf16.mxu0 0
    %775 = vmatpush2.bf16.msra.mxu0 0
    %776 = vmatprep.subr.bf16.mxu0 0
    %777 = vmatpush2.bf16.msra.mxu0 0
    %778 = vmatprep.subr.bf16.mxu0 0
    %779 = vmatpush2.bf16.msra.mxu0 0
    %780 = vmatprep.subr.bf16.mxu0 0
    %781 = vmatpush2.bf16.msra.mxu0 0
    %782 = vmatprep.mubr.bf16.mxu0 0
    %783 = vmatmul.mubr.bf16.gmra.mxu0 %v684
    %v784 = vpop.f32.mrf.mxu0
    %v785 = vadd.f32 0.0, %v784
    %v786 = vpop.f32.mrf.mxu0
    %v787 = vpop.f32.mrf.mxu0
    %v788 = vadd.f32 0.0, %v787
    %v789 = vpop.f32.mrf.mxu0
    %790 = vmatprep.mubr.bf16.mxu0 0
    %791 = vmatmul.mubr.bf16.gmra.mxu0 %v685
    %v792 = vpop.f32.mrf.mxu0
    %v793 = vadd.f32 0.0, %v792
    %v794 = vpop.f32.mrf.mxu0
    %v795 = vpop.f32.mrf.mxu0
    %v796 = vadd.f32 0.0, %v795
    %v797 = vpop.f32.mrf.mxu0
    %798 = vdwg.mxu0
    %v815 = vunpack.c.l.b16 %v668
    %v816 = vunpack.c.l.b16 %v669
    %v817 = vunpack.c.l.b16 %v670
    %v818 = vunpack.c.l.b16 %v671
    %v819 = vunpack.c.l.b16 %v672
    %v820 = vunpack.c.l.b16 %v673
    %v821 = vunpack.c.l.b16 %v674
    %v822 = vunpack.c.l.b16 %v675
    %v823 = vunpack.c.l.b16 %v676
    %v824 = vunpack.c.l.b16 %v677
    %v825 = vunpack.c.l.b16 %v678
    %v826 = vunpack.c.l.b16 %v679
    %v827 = vunpack.c.l.b16 %v680
    %v828 = vunpack.c.l.b16 %v681
    %v829 = vunpack.c.l.b16 %v682
    %v830 = vunpack.c.l.b16 %v683
    %v831 = vpack.c.b16 %v816, %v815
    %v832 = vpack.c.b16 %v818, %v817
    %v833 = vpack.c.b16 %v820, %v819
    %v834 = vpack.c.b16 %v822, %v821
    %v835 = vpack.c.b16 %v824, %v823
    %v836 = vpack.c.b16 %v826, %v825
    %v837 = vpack.c.b16 %v828, %v827
    %v838 = vpack.c.b16 %v830, %v829
    %847 = vmatprep.subr.bf16.mxu0 0
    %848 = vmatpush1.bf16.msra.mxu0 %v838
    %849 = vmatprep.subr.bf16.mxu0 0
    %850 = vmatpush1.bf16.msra.mxu0 %v837
    %851 = vmatprep.subr.bf16.mxu0 0
    %852 = vmatpush1.bf16.msra.mxu0 %v836
    %853 = vmatprep.subr.bf16.mxu0 0
    %854 = vmatpush1.bf16.msra.mxu0 %v835
    %855 = vmatprep.subr.bf16.mxu0 0
    %856 = vmatpush1.bf16.msra.mxu0 %v834
    %857 = vmatprep.subr.bf16.mxu0 0
    %858 = vmatpush1.bf16.msra.mxu0 %v833
    %859 = vmatprep.subr.bf16.mxu0 0
    %860 = vmatpush1.bf16.msra.mxu0 %v832
    %861 = vmatprep.subr.bf16.mxu0 0
    %862 = vmatpush1.bf16.msra.mxu0 %v831
    %863 = vmatprep.subr.bf16.mxu0 0
    %864 = vmatpush2.bf16.msra.mxu0 0
    %865 = vmatprep.subr.bf16.mxu0 0
    %866 = vmatpush2.bf16.msra.mxu0 0
    %867 = vmatprep.subr.bf16.mxu0 0
    %868 = vmatpush2.bf16.msra.mxu0 0
    %869 = vmatprep.subr.bf16.mxu0 0
    %870 = vmatpush2.bf16.msra.mxu0 0
    %871 = vmatprep.subr.bf16.mxu0 0
    %872 = vmatpush2.bf16.msra.mxu0 0
    %873 = vmatprep.subr.bf16.mxu0 0
    %874 = vmatpush2.bf16.msra.mxu0 0
    %875 = vmatprep.subr.bf16.mxu0 0
    %876 = vmatpush2.bf16.msra.mxu0 0
    %877 = vmatprep.subr.bf16.mxu0 0
    %878 = vmatpush2.bf16.msra.mxu0 0
    %879 = vmatprep.mubr.bf16.mxu0 0
    %880 = vmatmul.mubr.bf16.gmra.mxu0 %v666
    %v881 = vpop.f32.mrf.mxu0
    %v882 = vadd.f32 %v785, %v881
    %v883 = vpop.f32.mrf.mxu0
    %v884 = vpop.f32.mrf.mxu0
    %v885 = vadd.f32 %v788, %v884
    %v886 = vpop.f32.mrf.mxu0
    %887 = vmatprep.mubr.bf16.mxu0 0
    %888 = vmatmul.mubr.bf16.gmra.mxu0 %v667
    %v889 = vpop.f32.mrf.mxu0
    %v890 = vadd.f32 %v793, %v889
    %v891 = vpop.f32.mrf.mxu0
    %v892 = vpop.f32.mrf.mxu0
    %v893 = vadd.f32 %v796, %v892
    %v894 = vpop.f32.mrf.mxu0
    %895 = vdwg.mxu0
    %v896 = vld [vmem:[#allocation14] sm:$0x1]
    %v898 = vlaneseq
    %v899 = vshrl.u32 %v898, 7
    %v900 = vsub.s32 0, %v899
    %v901 = vrot.slane %v896, %v900
    %v903 = vmul.f32 %v882, %v901
    %v904 = vmul.f32 %v885, %v901
    %v905 = vmul.f32 %v890, %v901
    %v906 = vmul.f32 %v893, %v901
    %v907 = vld [vmem:[#allocation16] sm:$0x1]
    %v909 = vlaneseq
    %v910 = vshrl.u32 %v909, 7
    %v911 = vsub.s32 0, %v910
    %v912 = vrot.slane %v907, %v911
    %v914 = vadd.f32 %v903, %v912
    %v915 = vadd.f32 %v904, %v912
    %v916 = vadd.f32 %v905, %v912
    %v917 = vadd.f32 %v906, %v912
    %v918 = vmax.f32 %v914, 0.0
    %v919 = vmax.f32 %v915, 0.0
    %v920 = vmax.f32 %v916, 0.0
    %v921 = vmax.f32 %v917, 0.0
    %v922 = vrot.slane %v918, 7
    %v923 = vrot.slane %v919, 7
    %v924 = vrot.slane %v920, 7
    %v925 = vrot.slane %v921, 7
    %v926 = vsel %vm366, %v924, %v925
    %v927 = vsel %vm366, %v923, %v924
    %v928 = vsel %vm366, %v922, %v923
    %v929 = vsel %vm366, %v925, %v922
    %v930 = vsel %vm375, %v929, 0.0
    %v931 = vsel %vm376, %v928, 0.0
    %v932 = vsel %vm377, %v927, 0.0
    %v933 = vsel %vm378, %v926, 0.0
    %v934 = vpack.c.bf16 %v931, %v930
    %v935 = vpack.c.bf16 %v933, %v932
    %v936 = vld [vmem:[#allocation17] sm:$0xf]
    %v937 = vld [vmem:[#allocation17 + $0x4] sm:$0xf]
    %v938 = vld [vmem:[#allocation17 + $0x8] sm:$0xf]
    %v939 = vld [vmem:[#allocation17 + $0xc] sm:$0xf]
    %v940 = vld [vmem:[#allocation17 + $0x10] sm:$0xf]
    %v941 = vld [vmem:[#allocation17 + $0x14] sm:$0xf]
    %v942 = vld [vmem:[#allocation17 + $0x18] sm:$0xf]
    %v943 = vld [vmem:[#allocation17 + $0x1c] sm:$0xf]
    %v944 = vld [vmem:[#allocation17 + $0x20] sm:$0xf]
    %v945 = vld [vmem:[#allocation17 + $0x24] sm:$0xf]
    %v946 = vld [vmem:[#allocation17 + $0x28] sm:$0xf]
    %v947 = vld [vmem:[#allocation17 + $0x2c] sm:$0xf]
    %v948 = vld [vmem:[#allocation17 + $0x30] sm:$0xf]
    %v949 = vld [vmem:[#allocation17 + $0x34] sm:$0xf]
    %v950 = vld [vmem:[#allocation17 + $0x38] sm:$0xf]
    %v951 = vld [vmem:[#allocation17 + $0x3c] sm:$0xf]
    %v952 = vpack.c.bf16 %v919, %v918
    %v953 = vpack.c.bf16 %v921, %v920
    %v954 = vld [vmem:[%s11] sm:$0xf]
    %v955 = vld [vmem:[%s11 + $0x4] sm:$0xf]
    %v956 = vld [vmem:[%s11 + $0x8] sm:$0xf]
    %v957 = vld [vmem:[%s11 + $0xc] sm:$0xf]
    %v958 = vld [vmem:[%s11 + $0x10] sm:$0xf]
    %v959 = vld [vmem:[%s11 + $0x14] sm:$0xf]
    %v960 = vld [vmem:[%s11 + $0x18] sm:$0xf]
    %v961 = vld [vmem:[%s11 + $0x1c] sm:$0xf]
    %v962 = vld [vmem:[%s11 + $0x20] sm:$0xf]
    %v963 = vld [vmem:[%s11 + $0x24] sm:$0xf]
    %v964 = vld [vmem:[%s11 + $0x28] sm:$0xf]
    %v965 = vld [vmem:[%s11 + $0x2c] sm:$0xf]
    %v966 = vld [vmem:[%s11 + $0x30] sm:$0xf]
    %v967 = vld [vmem:[%s11 + $0x34] sm:$0xf]
    %v968 = vld [vmem:[%s11 + $0x38] sm:$0xf]
    %v969 = vld [vmem:[%s11 + $0x3c] sm:$0xf]
    %v986 = vunpack.c.l.b16 %v954
    %v987 = vunpack.c.l.b16 %v955
    %v988 = vunpack.c.l.b16 %v956
    %v989 = vunpack.c.l.b16 %v957
    %v990 = vunpack.c.l.b16 %v958
    %v991 = vunpack.c.l.b16 %v959
    %v992 = vunpack.c.l.b16 %v960
    %v993 = vunpack.c.l.b16 %v961
    %v994 = vunpack.c.l.b16 %v962
    %v995 = vunpack.c.l.b16 %v963
    %v996 = vunpack.c.l.b16 %v964
    %v997 = vunpack.c.l.b16 %v965
    %v998 = vunpack.c.l.b16 %v966
    %v999 = vunpack.c.l.b16 %v967
    %v1000 = vunpack.c.l.b16 %v968
    %v1001 = vunpack.c.l.b16 %v969
    %v1002 = vpack.c.b16 %v987, %v986
    %v1003 = vpack.c.b16 %v989, %v988
    %v1004 = vpack.c.b16 %v991, %v990
    %v1005 = vpack.c.b16 %v993, %v992
    %v1006 = vpack.c.b16 %v995, %v994
    %v1007 = vpack.c.b16 %v997, %v996
    %v1008 = vpack.c.b16 %v999, %v998
    %v1009 = vpack.c.b16 %v1001, %v1000
    %1018 = vmatprep.subr.bf16.mxu0 0
    %1019 = vmatpush1.bf16.msra.mxu0 %v1009
    %1020 = vmatprep.subr.bf16.mxu0 0
    %1021 = vmatpush1.bf16.msra.mxu0 %v1008
    %1022 = vmatprep.subr.bf16.mxu0 0
    %1023 = vmatpush1.bf16.msra.mxu0 %v1007
    %1024 = vmatprep.subr.bf16.mxu0 0
    %1025 = vmatpush1.bf16.msra.mxu0 %v1006
    %1026 = vmatprep.subr.bf16.mxu0 0
    %1027 = vmatpush1.bf16.msra.mxu0 %v1005
    %1028 = vmatprep.subr.bf16.mxu0 0
    %1029 = vmatpush1.bf16.msra.mxu0 %v1004
    %1030 = vmatprep.subr.bf16.mxu0 0
    %1031 = vmatpush1.bf16.msra.mxu0 %v1003
    %1032 = vmatprep.subr.bf16.mxu0 0
    %1033 = vmatpush1.bf16.msra.mxu0 %v1002
    %1034 = vmatprep.subr.bf16.mxu0 0
    %1035 = vmatpush2.bf16.msra.mxu0 0
    %1036 = vmatprep.subr.bf16.mxu0 0
    %1037 = vmatpush2.bf16.msra.mxu0 0
    %1038 = vmatprep.subr.bf16.mxu0 0
    %1039 = vmatpush2.bf16.msra.mxu0 0
    %1040 = vmatprep.subr.bf16.mxu0 0
    %1041 = vmatpush2.bf16.msra.mxu0 0
    %1042 = vmatprep.subr.bf16.mxu0 0
    %1043 = vmatpush2.bf16.msra.mxu0 0
    %1044 = vmatprep.subr.bf16.mxu0 0
    %1045 = vmatpush2.bf16.msra.mxu0 0
    %1046 = vmatprep.subr.bf16.mxu0 0
    %1047 = vmatpush2.bf16.msra.mxu0 0
    %1048 = vmatprep.subr.bf16.mxu0 0
    %1049 = vmatpush2.bf16.msra.mxu0 0
    %1050 = vmatprep.mubr.bf16.mxu0 0
    %1051 = vmatmul.mubr.bf16.gmra.mxu0 %v952
    %v1052 = vpop.f32.mrf.mxu0
    %v1053 = vadd.f32 0.0, %v1052
    %v1054 = vpop.f32.mrf.mxu0
    %v1055 = vpop.f32.mrf.mxu0
    %v1056 = vadd.f32 0.0, %v1055
    %v1057 = vpop.f32.mrf.mxu0
    %1058 = vmatprep.mubr.bf16.mxu0 0
    %1059 = vmatmul.mubr.bf16.gmra.mxu0 %v953
    %v1060 = vpop.f32.mrf.mxu0
    %v1061 = vadd.f32 0.0, %v1060
    %v1062 = vpop.f32.mrf.mxu0
    %v1063 = vpop.f32.mrf.mxu0
    %v1064 = vadd.f32 0.0, %v1063
    %v1065 = vpop.f32.mrf.mxu0
    %1066 = vdwg.mxu0
    %v1083 = vunpack.c.l.b16 %v936
    %v1084 = vunpack.c.l.b16 %v937
    %v1085 = vunpack.c.l.b16 %v938
    %v1086 = vunpack.c.l.b16 %v939
    %v1087 = vunpack.c.l.b16 %v940
    %v1088 = vunpack.c.l.b16 %v941
    %v1089 = vunpack.c.l.b16 %v942
    %v1090 = vunpack.c.l.b16 %v943
    %v1091 = vunpack.c.l.b16 %v944
    %v1092 = vunpack.c.l.b16 %v945
    %v1093 = vunpack.c.l.b16 %v946
    %v1094 = vunpack.c.l.b16 %v947
    %v1095 = vunpack.c.l.b16 %v948
    %v1096 = vunpack.c.l.b16 %v949
    %v1097 = vunpack.c.l.b16 %v950
    %v1098 = vunpack.c.l.b16 %v951
    %v1099 = vpack.c.b16 %v1084, %v1083
    %v1100 = vpack.c.b16 %v1086, %v1085
    %v1101 = vpack.c.b16 %v1088, %v1087
    %v1102 = vpack.c.b16 %v1090, %v1089
    %v1103 = vpack.c.b16 %v1092, %v1091
    %v1104 = vpack.c.b16 %v1094, %v1093
    %v1105 = vpack.c.b16 %v1096, %v1095
    %v1106 = vpack.c.b16 %v1098, %v1097
    %1115 = vmatprep.subr.bf16.mxu0 0
    %1116 = vmatpush1.bf16.msra.mxu0 %v1106
    %1117 = vmatprep.subr.bf16.mxu0 0
    %1118 = vmatpush1.bf16.msra.mxu0 %v1105
    %1119 = vmatprep.subr.bf16.mxu0 0
    %1120 = vmatpush1.bf16.msra.mxu0 %v1104
    %1121 = vmatprep.subr.bf16.mxu0 0
    %1122 = vmatpush1.bf16.msra.mxu0 %v1103
    %1123 = vmatprep.subr.bf16.mxu0 0
    %1124 = vmatpush1.bf16.msra.mxu0 %v1102
    %1125 = vmatprep.subr.bf16.mxu0 0
    %1126 = vmatpush1.bf16.msra.mxu0 %v1101
    %1127 = vmatprep.subr.bf16.mxu0 0
    %1128 = vmatpush1.bf16.msra.mxu0 %v1100
    %1129 = vmatprep.subr.bf16.mxu0 0
    %1130 = vmatpush1.bf16.msra.mxu0 %v1099
    %1131 = vmatprep.subr.bf16.mxu0 0
    %1132 = vmatpush2.bf16.msra.mxu0 0
    %1133 = vmatprep.subr.bf16.mxu0 0
    %1134 = vmatpush2.bf16.msra.mxu0 0
    %1135 = vmatprep.subr.bf16.mxu0 0
    %1136 = vmatpush2.bf16.msra.mxu0 0
    %1137 = vmatprep.subr.bf16.mxu0 0
    %1138 = vmatpush2.bf16.msra.mxu0 0
    %1139 = vmatprep.subr.bf16.mxu0 0
    %1140 = vmatpush2.bf16.msra.mxu0 0
    %1141 = vmatprep.subr.bf16.mxu0 0
    %1142 = vmatpush2.bf16.msra.mxu0 0
    %1143 = vmatprep.subr.bf16.mxu0 0
    %1144 = vmatpush2.bf16.msra.mxu0 0
    %1145 = vmatprep.subr.bf16.mxu0 0
    %1146 = vmatpush2.bf16.msra.mxu0 0
    %1147 = vmatprep.mubr.bf16.mxu0 0
    %1148 = vmatmul.mubr.bf16.gmra.mxu0 %v934
    %v1149 = vpop.f32.mrf.mxu0
    %v1150 = vadd.f32 %v1053, %v1149
    %v1151 = vpop.f32.mrf.mxu0
    %v1152 = vpop.f32.mrf.mxu0
    %v1153 = vadd.f32 %v1056, %v1152
    %v1154 = vpop.f32.mrf.mxu0
    %1155 = vmatprep.mubr.bf16.mxu0 0
    %1156 = vmatmul.mubr.bf16.gmra.mxu0 %v935
    %v1157 = vpop.f32.mrf.mxu0
    %v1158 = vadd.f32 %v1061, %v1157
    %v1159 = vpop.f32.mrf.mxu0
    %v1160 = vpop.f32.mrf.mxu0
    %v1161 = vadd.f32 %v1064, %v1160
    %v1162 = vpop.f32.mrf.mxu0
    %1163 = vdwg.mxu0
    %v1164 = vld [vmem:[%s12] sm:$0x1]
    %v1166 = vlaneseq
    %v1167 = vshrl.u32 %v1166, 7
    %v1168 = vsub.s32 0, %v1167
    %v1169 = vrot.slane %v1164, %v1168
    %v1171 = vmul.f32 %v1150, %v1169
    %v1172 = vmul.f32 %v1153, %v1169
    %v1173 = vmul.f32 %v1158, %v1169
    %v1174 = vmul.f32 %v1161, %v1169
    %v1175 = vld [vmem:[%s13] sm:$0x1]
    %v1177 = vlaneseq
    %v1178 = vshrl.u32 %v1177, 7
    %v1179 = vsub.s32 0, %v1178
    %v1180 = vrot.slane %v1175, %v1179
    %v1182 = vadd.f32 %v1171, %v1180
    %v1183 = vadd.f32 %v1172, %v1180
    %v1184 = vadd.f32 %v1173, %v1180
    %v1185 = vadd.f32 %v1174, %v1180
    %v1186 = vmax.f32 %v1182, 0.0
    %v1187 = vmax.f32 %v1183, 0.0
    %v1188 = vmax.f32 %v1184, 0.0
    %v1189 = vmax.f32 %v1185, 0.0
    %v1190 = vrot.slane %v1186, 7
    %v1191 = vrot.slane %v1187, 7
    %v1192 = vrot.slane %v1188, 7
    %v1193 = vrot.slane %v1189, 7
    %v1194 = vsel %vm366, %v1192, %v1193
    %v1195 = vsel %vm366, %v1191, %v1192
    %v1196 = vsel %vm366, %v1190, %v1191
    %v1197 = vsel %vm366, %v1193, %v1190
    %v1198 = vsel %vm375, %v1197, 0.0
    %v1199 = vsel %vm376, %v1196, 0.0
    %v1200 = vsel %vm377, %v1195, 0.0
    %v1201 = vsel %vm378, %v1194, 0.0
    %v1202 = vpack.c.bf16 %v1199, %v1198
    %v1203 = vpack.c.bf16 %v1201, %v1200
    %v1204 = vld [vmem:[%s14] sm:$0xff]
    %v1205 = vld [vmem:[%s14 + $0x8] sm:$0xff]
    %v1206 = vld [vmem:[%s14 + $0x10] sm:$0xff]
    %v1207 = vld [vmem:[%s14 + $0x18] sm:$0xff]
    %v1208 = vld [vmem:[%s14 + $0x20] sm:$0xff]
    %v1209 = vld [vmem:[%s14 + $0x28] sm:$0xff]
    %v1210 = vld [vmem:[%s14 + $0x30] sm:$0xff]
    %v1211 = vld [vmem:[%s14 + $0x38] sm:$0xff]
    %v1212 = vld [vmem:[%s14 + $0x40] sm:$0xff]
    %v1213 = vld [vmem:[%s14 + $0x48] sm:$0xff]
    %v1214 = vld [vmem:[%s14 + $0x50] sm:$0xff]
    %v1215 = vld [vmem:[%s14 + $0x58] sm:$0xff]
    %v1216 = vld [vmem:[%s14 + $0x60] sm:$0xff]
    %v1217 = vld [vmem:[%s14 + $0x68] sm:$0xff]
    %v1218 = vld [vmem:[%s14 + $0x70] sm:$0xff]
    %v1219 = vld [vmem:[%s14 + $0x78] sm:$0xff]
    %v1220 = vpack.c.bf16 %v1187, %v1186
    %v1221 = vpack.c.bf16 %v1189, %v1188
    %v1222 = vld [vmem:[%s15] sm:$0xff]
    %v1223 = vld [vmem:[%s15 + $0x8] sm:$0xff]
    %v1224 = vld [vmem:[%s15 + $0x10] sm:$0xff]
    %v1225 = vld [vmem:[%s15 + $0x18] sm:$0xff]
    %v1226 = vld [vmem:[%s15 + $0x20] sm:$0xff]
    %v1227 = vld [vmem:[%s15 + $0x28] sm:$0xff]
    %v1228 = vld [vmem:[%s15 + $0x30] sm:$0xff]
    %v1229 = vld [vmem:[%s15 + $0x38] sm:$0xff]
    %v1230 = vld [vmem:[%s15 + $0x40] sm:$0xff]
    %v1231 = vld [vmem:[%s15 + $0x48] sm:$0xff]
    %v1232 = vld [vmem:[%s15 + $0x50] sm:$0xff]
    %v1233 = vld [vmem:[%s15 + $0x58] sm:$0xff]
    %v1234 = vld [vmem:[%s15 + $0x60] sm:$0xff]
    %v1235 = vld [vmem:[%s15 + $0x68] sm:$0xff]
    %v1236 = vld [vmem:[%s15 + $0x70] sm:$0xff]
    %v1237 = vld [vmem:[%s15 + $0x78] sm:$0xff]
    %v1254 = vunpack.c.l.b16 %v1222
    %v1255 = vunpack.c.h.b16 %v1222
    %v1256 = vunpack.c.l.b16 %v1223
    %v1257 = vunpack.c.h.b16 %v1223
    %v1258 = vunpack.c.l.b16 %v1224
    %v1259 = vunpack.c.h.b16 %v1224
    %v1260 = vunpack.c.l.b16 %v1225
    %v1261 = vunpack.c.h.b16 %v1225
    %v1262 = vunpack.c.l.b16 %v1226
    %v1263 = vunpack.c.h.b16 %v1226
    %v1264 = vunpack.c.l.b16 %v1227
    %v1265 = vunpack.c.h.b16 %v1227
    %v1266 = vunpack.c.l.b16 %v1228
    %v1267 = vunpack.c.h.b16 %v1228
    %v1268 = vunpack.c.l.b16 %v1229
    %v1269 = vunpack.c.h.b16 %v1229
    %v1270 = vunpack.c.l.b16 %v1230
    %v1271 = vunpack.c.h.b16 %v1230
    %v1272 = vunpack.c.l.b16 %v1231
    %v1273 = vunpack.c.h.b16 %v1231
    %v1274 = vunpack.c.l.b16 %v1232
    %v1275 = vunpack.c.h.b16 %v1232
    %v1276 = vunpack.c.l.b16 %v1233
    %v1277 = vunpack.c.h.b16 %v1233
    %v1278 = vunpack.c.l.b16 %v1234
    %v1279 = vunpack.c.h.b16 %v1234
    %v1280 = vunpack.c.l.b16 %v1235
    %v1281 = vunpack.c.h.b16 %v1235
    %v1282 = vunpack.c.l.b16 %v1236
    %v1283 = vunpack.c.h.b16 %v1236
    %v1284 = vunpack.c.l.b16 %v1237
    %v1285 = vunpack.c.h.b16 %v1237
    %v1286 = vpack.c.b16 %v1256, %v1254
    %v1287 = vpack.c.b16 %v1257, %v1255
    %v1288 = vpack.c.b16 %v1260, %v1258
    %v1289 = vpack.c.b16 %v1261, %v1259
    %v1290 = vpack.c.b16 %v1264, %v1262
    %v1291 = vpack.c.b16 %v1265, %v1263
    %v1292 = vpack.c.b16 %v1268, %v1266
    %v1293 = vpack.c.b16 %v1269, %v1267
    %v1294 = vpack.c.b16 %v1272, %v1270
    %v1295 = vpack.c.b16 %v1273, %v1271
    %v1296 = vpack.c.b16 %v1276, %v1274
    %v1297 = vpack.c.b16 %v1277, %v1275
    %v1298 = vpack.c.b16 %v1280, %v1278
    %v1299 = vpack.c.b16 %v1281, %v1279
    %v1300 = vpack.c.b16 %v1284, %v1282
    %v1301 = vpack.c.b16 %v1285, %v1283
    %1318 = vmatprep.subr.bf16.mxu0 %v1301
    %1319 = vmatpush1.bf16.msra.mxu0 %v1300
    %1320 = vmatprep.subr.bf16.mxu0 %v1299
    %1321 = vmatpush1.bf16.msra.mxu0 %v1298
    %1322 = vmatprep.subr.bf16.mxu0 %v1297
    %1323 = vmatpush1.bf16.msra.mxu0 %v1296
    %1324 = vmatprep.subr.bf16.mxu0 %v1295
    %1325 = vmatpush1.bf16.msra.mxu0 %v1294
    %1326 = vmatprep.subr.bf16.mxu0 %v1293
    %1327 = vmatpush1.bf16.msra.mxu0 %v1292
    %1328 = vmatprep.subr.bf16.mxu0 %v1291
    %1329 = vmatpush1.bf16.msra.mxu0 %v1290
    %1330 = vmatprep.subr.bf16.mxu0 %v1289
    %1331 = vmatpush1.bf16.msra.mxu0 %v1288
    %1332 = vmatprep.subr.bf16.mxu0 %v1287
    %1333 = vmatpush1.bf16.msra.mxu0 %v1286
    %1334 = vmatprep.subr.bf16.mxu0 0
    %1335 = vmatpush2.bf16.msra.mxu0 0
    %1336 = vmatprep.subr.bf16.mxu0 0
    %1337 = vmatpush2.bf16.msra.mxu0 0
    %1338 = vmatprep.subr.bf16.mxu0 0
    %1339 = vmatpush2.bf16.msra.mxu0 0
    %1340 = vmatprep.subr.bf16.mxu0 0
    %1341 = vmatpush2.bf16.msra.mxu0 0
    %1342 = vmatprep.subr.bf16.mxu0 0
    %1343 = vmatpush2.bf16.msra.mxu0 0
    %1344 = vmatprep.subr.bf16.mxu0 0
    %1345 = vmatpush2.bf16.msra.mxu0 0
    %1346 = vmatprep.subr.bf16.mxu0 0
    %1347 = vmatpush2.bf16.msra.mxu0 0
    %1348 = vmatprep.subr.bf16.mxu0 0
    %1349 = vmatpush2.bf16.msra.mxu0 0
    %1350 = vmatprep.mubr.bf16.mxu0 0
    %1351 = vmatmul.mubr.bf16.gmra.mxu0 %v1220
    %v1352 = vpop.f32.mrf.mxu0
    %v1353 = vadd.f32 0.0, %v1352
    %v1354 = vpop.f32.mrf.mxu0
    %v1355 = vadd.f32 0.0, %v1354
    %v1356 = vpop.f32.mrf.mxu0
    %v1357 = vadd.f32 0.0, %v1356
    %v1358 = vpop.f32.mrf.mxu0
    %v1359 = vadd.f32 0.0, %v1358
    %1360 = vmatprep.mubr.bf16.mxu0 0
    %1361 = vmatmul.mubr.bf16.gmra.mxu0 %v1221
    %v1362 = vpop.f32.mrf.mxu0
    %v1363 = vadd.f32 0.0, %v1362
    %v1364 = vpop.f32.mrf.mxu0
    %v1365 = vadd.f32 0.0, %v1364
    %v1366 = vpop.f32.mrf.mxu0
    %v1367 = vadd.f32 0.0, %v1366
    %v1368 = vpop.f32.mrf.mxu0
    %v1369 = vadd.f32 0.0, %v1368
    %1370 = vdwg.mxu0
    %v1387 = vunpack.c.l.b16 %v1204
    %v1388 = vunpack.c.h.b16 %v1204
    %v1389 = vunpack.c.l.b16 %v1205
    %v1390 = vunpack.c.h.b16 %v1205
    %v1391 = vunpack.c.l.b16 %v1206
    %v1392 = vunpack.c.h.b16 %v1206
    %v1393 = vunpack.c.l.b16 %v1207
    %v1394 = vunpack.c.h.b16 %v1207
    %v1395 = vunpack.c.l.b16 %v1208
    %v1396 = vunpack.c.h.b16 %v1208
    %v1397 = vunpack.c.l.b16 %v1209
    %v1398 = vunpack.c.h.b16 %v1209
    %v1399 = vunpack.c.l.b16 %v1210
    %v1400 = vunpack.c.h.b16 %v1210
    %v1401 = vunpack.c.l.b16 %v1211
    %v1402 = vunpack.c.h.b16 %v1211
    %v1403 = vunpack.c.l.b16 %v1212
    %v1404 = vunpack.c.h.b16 %v1212
    %v1405 = vunpack.c.l.b16 %v1213
    %v1406 = vunpack.c.h.b16 %v1213
    %v1407 = vunpack.c.l.b16 %v1214
    %v1408 = vunpack.c.h.b16 %v1214
    %v1409 = vunpack.c.l.b16 %v1215
    %v1410 = vunpack.c.h.b16 %v1215
    %v1411 = vunpack.c.l.b16 %v1216
    %v1412 = vunpack.c.h.b16 %v1216
    %v1413 = vunpack.c.l.b16 %v1217
    %v1414 = vunpack.c.h.b16 %v1217
    %v1415 = vunpack.c.l.b16 %v1218
    %v1416 = vunpack.c.h.b16 %v1218
    %v1417 = vunpack.c.l.b16 %v1219
    %v1418 = vunpack.c.h.b16 %v1219
    %v1419 = vpack.c.b16 %v1389, %v1387
    %v1420 = vpack.c.b16 %v1390, %v1388
    %v1421 = vpack.c.b16 %v1393, %v1391
    %v1422 = vpack.c.b16 %v1394, %v1392
    %v1423 = vpack.c.b16 %v1397, %v1395
    %v1424 = vpack.c.b16 %v1398, %v1396
    %v1425 = vpack.c.b16 %v1401, %v1399
    %v1426 = vpack.c.b16 %v1402, %v1400
    %v1427 = vpack.c.b16 %v1405, %v1403
    %v1428 = vpack.c.b16 %v1406, %v1404
    %v1429 = vpack.c.b16 %v1409, %v1407
    %v1430 = vpack.c.b16 %v1410, %v1408
    %v1431 = vpack.c.b16 %v1413, %v1411
    %v1432 = vpack.c.b16 %v1414, %v1412
    %v1433 = vpack.c.b16 %v1417, %v1415
    %v1434 = vpack.c.b16 %v1418, %v1416
    %1451 = vmatprep.subr.bf16.mxu0 %v1434
    %1452 = vmatpush1.bf16.msra.mxu0 %v1433
    %1453 = vmatprep.subr.bf16.mxu0 %v1432
    %1454 = vmatpush1.bf16.msra.mxu0 %v1431
    %1455 = vmatprep.subr.bf16.mxu0 %v1430
    %1456 = vmatpush1.bf16.msra.mxu0 %v1429
    %1457 = vmatprep.subr.bf16.mxu0 %v1428
    %1458 = vmatpush1.bf16.msra.mxu0 %v1427
    %1459 = vmatprep.subr.bf16.mxu0 %v1426
    %1460 = vmatpush1.bf16.msra.mxu0 %v1425
    %1461 = vmatprep.subr.bf16.mxu0 %v1424
    %1462 = vmatpush1.bf16.msra.mxu0 %v1423
    %1463 = vmatprep.subr.bf16.mxu0 %v1422
    %1464 = vmatpush1.bf16.msra.mxu0 %v1421
    %1465 = vmatprep.subr.bf16.mxu0 %v1420
    %1466 = vmatpush1.bf16.msra.mxu0 %v1419
    %1467 = vmatprep.subr.bf16.mxu0 0
    %1468 = vmatpush2.bf16.msra.mxu0 0
    %1469 = vmatprep.subr.bf16.mxu0 0
    %1470 = vmatpush2.bf16.msra.mxu0 0
    %1471 = vmatprep.subr.bf16.mxu0 0
    %1472 = vmatpush2.bf16.msra.mxu0 0
    %1473 = vmatprep.subr.bf16.mxu0 0
    %1474 = vmatpush2.bf16.msra.mxu0 0
    %1475 = vmatprep.subr.bf16.mxu0 0
    %1476 = vmatpush2.bf16.msra.mxu0 0
    %1477 = vmatprep.subr.bf16.mxu0 0
    %1478 = vmatpush2.bf16.msra.mxu0 0
    %1479 = vmatprep.subr.bf16.mxu0 0
    %1480 = vmatpush2.bf16.msra.mxu0 0
    %1481 = vmatprep.subr.bf16.mxu0 0
    %1482 = vmatpush2.bf16.msra.mxu0 0
    %1483 = vmatprep.mubr.bf16.mxu0 0
    %1484 = vmatmul.mubr.bf16.gmra.mxu0 %v1202
    %v1485 = vpop.f32.mrf.mxu0
    %v1486 = vadd.f32 %v1353, %v1485
    %v1487 = vpop.f32.mrf.mxu0
    %v1488 = vadd.f32 %v1355, %v1487
    %v1489 = vpop.f32.mrf.mxu0
    %v1490 = vadd.f32 %v1357, %v1489
    %v1491 = vpop.f32.mrf.mxu0
    %v1492 = vadd.f32 %v1359, %v1491
    %1493 = vmatprep.mubr.bf16.mxu0 0
    %1494 = vmatmul.mubr.bf16.gmra.mxu0 %v1203
    %v1495 = vpop.f32.mrf.mxu0
    %v1496 = vadd.f32 %v1363, %v1495
    %v1497 = vpop.f32.mrf.mxu0
    %v1498 = vadd.f32 %v1365, %v1497
    %v1499 = vpop.f32.mrf.mxu0
    %v1500 = vadd.f32 %v1367, %v1499
    %v1501 = vpop.f32.mrf.mxu0
    %v1502 = vadd.f32 %v1369, %v1501
    %1503 = vdwg.mxu0
    %v1504 = vrot.slane %v1186, 1
    %v1505 = vrot.slane %v1187, 1
    %v1506 = vrot.slane %v1188, 1
    %v1507 = vrot.slane %v1189, 1
    %v1508 = vsel %vm534, %v1506, %v1507
    %v1509 = vsel %vm534, %v1505, %v1506
    %v1510 = vsel %vm534, %v1504, %v1505
    %v1511 = vsel %vm534, %v1507, %v1504
    %v1512 = vsel %vm543, %v1510, 0.0
    %v1513 = vsel %vm544, %v1509, 0.0
    %v1514 = vsel %vm545, %v1508, 0.0
    %v1515 = vsel %vm546, %v1511, 0.0
    %v1516 = vpack.c.bf16 %v1513, %v1512
    %v1517 = vpack.c.bf16 %v1515, %v1514
    %v1518 = vld [vmem:[#allocation19] sm:$0xff]
    %v1519 = vld [vmem:[#allocation19 + $0x8] sm:$0xff]
    %v1520 = vld [vmem:[#allocation19 + $0x10] sm:$0xff]
    %v1521 = vld [vmem:[#allocation19 + $0x18] sm:$0xff]
    %v1522 = vld [vmem:[#allocation19 + $0x20] sm:$0xff]
    %v1523 = vld [vmem:[#allocation19 + $0x28] sm:$0xff]
    %v1524 = vld [vmem:[#allocation19 + $0x30] sm:$0xff]
    %v1525 = vld [vmem:[#allocation19 + $0x38] sm:$0xff]
    %v1526 = vld [vmem:[#allocation19 + $0x40] sm:$0xff]
    %v1527 = vld [vmem:[#allocation19 + $0x48] sm:$0xff]
    %v1528 = vld [vmem:[#allocation19 + $0x50] sm:$0xff]
    %v1529 = vld [vmem:[#allocation19 + $0x58] sm:$0xff]
    %v1530 = vld [vmem:[#allocation19 + $0x60] sm:$0xff]
    %v1531 = vld [vmem:[#allocation19 + $0x68] sm:$0xff]
    %v1532 = vld [vmem:[#allocation19 + $0x70] sm:$0xff]
    %v1533 = vld [vmem:[#allocation19 + $0x78] sm:$0xff]
    %v1550 = vunpack.c.l.b16 %v1518
    %v1551 = vunpack.c.h.b16 %v1518
    %v1552 = vunpack.c.l.b16 %v1519
    %v1553 = vunpack.c.h.b16 %v1519
    %v1554 = vunpack.c.l.b16 %v1520
    %v1555 = vunpack.c.h.b16 %v1520
    %v1556 = vunpack.c.l.b16 %v1521
    %v1557 = vunpack.c.h.b16 %v1521
    %v1558 = vunpack.c.l.b16 %v1522
    %v1559 = vunpack.c.h.b16 %v1522
    %v1560 = vunpack.c.l.b16 %v1523
    %v1561 = vunpack.c.h.b16 %v1523
    %v1562 = vunpack.c.l.b16 %v1524
    %v1563 = vunpack.c.h.b16 %v1524
    %v1564 = vunpack.c.l.b16 %v1525
    %v1565 = vunpack.c.h.b16 %v1525
    %v1566 = vunpack.c.l.b16 %v1526
    %v1567 = vunpack.c.h.b16 %v1526
    %v1568 = vunpack.c.l.b16 %v1527
    %v1569 = vunpack.c.h.b16 %v1527
    %v1570 = vunpack.c.l.b16 %v1528
    %v1571 = vunpack.c.h.b16 %v1528
    %v1572 = vunpack.c.l.b16 %v1529
    %v1573 = vunpack.c.h.b16 %v1529
    %v1574 = vunpack.c.l.b16 %v1530
    %v1575 = vunpack.c.h.b16 %v1530
    %v1576 = vunpack.c.l.b16 %v1531
    %v1577 = vunpack.c.h.b16 %v1531
    %v1578 = vunpack.c.l.b16 %v1532
    %v1579 = vunpack.c.h.b16 %v1532
    %v1580 = vunpack.c.l.b16 %v1533
    %v1581 = vunpack.c.h.b16 %v1533
    %v1582 = vpack.c.b16 %v1552, %v1550
    %v1583 = vpack.c.b16 %v1553, %v1551
    %v1584 = vpack.c.b16 %v1556, %v1554
    %v1585 = vpack.c.b16 %v1557, %v1555
    %v1586 = vpack.c.b16 %v1560, %v1558
    %v1587 = vpack.c.b16 %v1561, %v1559
    %v1588 = vpack.c.b16 %v1564, %v1562
    %v1589 = vpack.c.b16 %v1565, %v1563
    %v1590 = vpack.c.b16 %v1568, %v1566
    %v1591 = vpack.c.b16 %v1569, %v1567
    %v1592 = vpack.c.b16 %v1572, %v1570
    %v1593 = vpack.c.b16 %v1573, %v1571
    %v1594 = vpack.c.b16 %v1576, %v1574
    %v1595 = vpack.c.b16 %v1577, %v1575
    %v1596 = vpack.c.b16 %v1580, %v1578
    %v1597 = vpack.c.b16 %v1581, %v1579
    %1614 = vmatprep.subr.bf16.mxu0 %v1597
    %1615 = vmatpush1.bf16.msra.mxu0 %v1596
    %1616 = vmatprep.subr.bf16.mxu0 %v1595
    %1617 = vmatpush1.bf16.msra.mxu0 %v1594
    %1618 = vmatprep.subr.bf16.mxu0 %v1593
    %1619 = vmatpush1.bf16.msra.mxu0 %v1592
    %1620 = vmatprep.subr.bf16.mxu0 %v1591
    %1621 = vmatpush1.bf16.msra.mxu0 %v1590
    %1622 = vmatprep.subr.bf16.mxu0 %v1589
    %1623 = vmatpush1.bf16.msra.mxu0 %v1588
    %1624 = vmatprep.subr.bf16.mxu0 %v1587
    %1625 = vmatpush1.bf16.msra.mxu0 %v1586
    %1626 = vmatprep.subr.bf16.mxu0 %v1585
    %1627 = vmatpush1.bf16.msra.mxu0 %v1584
    %1628 = vmatprep.subr.bf16.mxu0 %v1583
    %1629 = vmatpush1.bf16.msra.mxu0 %v1582
    %1630 = vmatprep.subr.bf16.mxu0 0
    %1631 = vmatpush2.bf16.msra.mxu0 0
    %1632 = vmatprep.subr.bf16.mxu0 0
    %1633 = vmatpush2.bf16.msra.mxu0 0
    %1634 = vmatprep.subr.bf16.mxu0 0
    %1635 = vmatpush2.bf16.msra.mxu0 0
    %1636 = vmatprep.subr.bf16.mxu0 0
    %1637 = vmatpush2.bf16.msra.mxu0 0
    %1638 = vmatprep.subr.bf16.mxu0 0
    %1639 = vmatpush2.bf16.msra.mxu0 0
    %1640 = vmatprep.subr.bf16.mxu0 0
    %1641 = vmatpush2.bf16.msra.mxu0 0
    %1642 = vmatprep.subr.bf16.mxu0 0
    %1643 = vmatpush2.bf16.msra.mxu0 0
    %1644 = vmatprep.subr.bf16.mxu0 0
    %1645 = vmatpush2.bf16.msra.mxu0 0
    %1646 = vmatprep.mubr.bf16.mxu0 0
    %1647 = vmatmul.mubr.bf16.gmra.mxu0 %v1516
    %v1648 = vpop.f32.mrf.mxu0
    %v1649 = vadd.f32 0.0, %v1648
    %v1650 = vpop.f32.mrf.mxu0
    %v1651 = vadd.f32 0.0, %v1650
    %v1652 = vpop.f32.mrf.mxu0
    %v1653 = vadd.f32 0.0, %v1652
    %v1654 = vpop.f32.mrf.mxu0
    %v1655 = vadd.f32 0.0, %v1654
    %1656 = vmatprep.mubr.bf16.mxu0 0
    %1657 = vmatmul.mubr.bf16.gmra.mxu0 %v1517
    %v1658 = vpop.f32.mrf.mxu0
    %v1659 = vadd.f32 0.0, %v1658
    %v1660 = vpop.f32.mrf.mxu0
    %v1661 = vadd.f32 0.0, %v1660
    %v1662 = vpop.f32.mrf.mxu0
    %v1663 = vadd.f32 0.0, %v1662
    %v1664 = vpop.f32.mrf.mxu0
    %v1665 = vadd.f32 0.0, %v1664
    %1666 = vdwg.mxu0
    %v1667 = vadd.f32 %v1486, %v1649
    %v1668 = vadd.f32 %v1488, %v1651
    %v1669 = vadd.f32 %v1490, %v1653
    %v1670 = vadd.f32 %v1492, %v1655
    %v1671 = vadd.f32 %v1496, %v1659
    %v1672 = vadd.f32 %v1498, %v1661
    %v1673 = vadd.f32 %v1500, %v1663
    %v1674 = vadd.f32 %v1502, %v1665
    %v1675 = vld [vmem:[%s17] sm:$0x3]
    %v1677 = vlaneseq
    %v1678 = vshrl.u32 %v1677, 7
    %v1679 = vsub.s32 0, %v1678
    %v1680 = vrot.slane %v1675, %v1679
    %v1681 = vlaneseq
    %v1682 = vshrl.u32 %v1681, 7
    %v1683 = vsub.s32 1, %v1682
    %v1684 = vrot.slane %v1675, %v1683
    %v1687 = vmul.f32 %v1667, %v1680
    %v1688 = vmul.f32 %v1668, %v1684
    %v1689 = vmul.f32 %v1669, %v1680
    %v1690 = vmul.f32 %v1670, %v1684
    %v1691 = vmul.f32 %v1671, %v1680
    %v1692 = vmul.f32 %v1672, %v1684
    %v1693 = vmul.f32 %v1673, %v1680
    %v1694 = vmul.f32 %v1674, %v1684
    %v1695 = vld [vmem:[#allocation20] sm:$0x3]
    %v1697 = vlaneseq
    %v1698 = vshrl.u32 %v1697, 7
    %v1699 = vsub.s32 0, %v1698
    %v1700 = vrot.slane %v1695, %v1699
    %v1701 = vlaneseq
    %v1702 = vshrl.u32 %v1701, 7
    %v1703 = vsub.s32 1, %v1702
    %v1704 = vrot.slane %v1695, %v1703
    %v1707 = vadd.f32 %v1687, %v1700
    %v1708 = vadd.f32 %v1688, %v1704
    %v1709 = vadd.f32 %v1689, %v1700
    %v1710 = vadd.f32 %v1690, %v1704
    %v1711 = vadd.f32 %v1691, %v1700
    %v1712 = vadd.f32 %v1692, %v1704
    %v1713 = vadd.f32 %v1693, %v1700
    %v1714 = vadd.f32 %v1694, %v1704
    %v1715 = vmax.f32 %v1707, 0.0
    %v1716 = vmax.f32 %v1708, 0.0
    %v1717 = vmax.f32 %v1709, 0.0
    %v1718 = vmax.f32 %v1710, 0.0
    %v1719 = vmax.f32 %v1711, 0.0
    %v1720 = vmax.f32 %v1712, 0.0
    %v1721 = vmax.f32 %v1713, 0.0
    %v1722 = vmax.f32 %v1714, 0.0
    %v1723 = vadd.f32 %v1715, %v1717
    %v1724 = vrot.slane %v1723, 4
    %v1725 = vadd.f32 %v1723, %v1724
    %v1726 = vrot.slane %v1725, 2
    %v1727 = vadd.f32 %v1725, %v1726
    %v1728 = vrot.slane %v1727, 1
    %v1729 = vadd.f32 %v1727, %v1728
    %v1730 = vadd.f32 %v1716, %v1718
    %v1731 = vrot.slane %v1730, 4
    %v1732 = vadd.f32 %v1730, %v1731
    %v1733 = vrot.slane %v1732, 2
    %v1734 = vadd.f32 %v1732, %v1733
    %v1735 = vrot.slane %v1734, 1
    %v1736 = vadd.f32 %v1734, %v1735
    %v1737 = vadd.f32 %v1719, %v1721
    %v1738 = vrot.slane %v1737, 4
    %v1739 = vadd.f32 %v1737, %v1738
    %v1740 = vrot.slane %v1739, 2
    %v1741 = vadd.f32 %v1739, %v1740
    %v1742 = vrot.slane %v1741, 1
    %v1743 = vadd.f32 %v1741, %v1742
    %v1744 = vadd.f32 %v1720, %v1722
    %v1745 = vrot.slane %v1744, 4
    %v1746 = vadd.f32 %v1744, %v1745
    %v1747 = vrot.slane %v1746, 2
    %v1748 = vadd.f32 %v1746, %v1747
    %v1749 = vrot.slane %v1748, 1
    %v1750 = vadd.f32 %v1748, %v1749
    %v1751 = vrcp.pop 16.0
    %v1752 = vmul.f32 %v1729, %v1751
    %v1753 = vmul.f32 %v1736, %v1751
    %v1754 = vmul.f32 %v1743, %v1751
    %v1755 = vmul.f32 %v1750, %v1751
    %v1756 = vmax.f32 %v1715, %v1717
    %v1757 = vrot.slane %v1756, 4
    %v1758 = vmax.f32 %v1756, %v1757
    %v1759 = vrot.slane %v1758, 2
    %v1760 = vmax.f32 %v1758, %v1759
    %v1761 = vrot.slane %v1760, 1
    %v1762 = vmax.f32 %v1760, %v1761
    %v1763 = vmax.f32 %v1716, %v1718
    %v1764 = vrot.slane %v1763, 4
    %v1765 = vmax.f32 %v1763, %v1764
    %v1766 = vrot.slane %v1765, 2
    %v1767 = vmax.f32 %v1765, %v1766
    %v1768 = vrot.slane %v1767, 1
    %v1769 = vmax.f32 %v1767, %v1768
    %v1770 = vmax.f32 %v1719, %v1721
    %v1771 = vrot.slane %v1770, 4
    %v1772 = vmax.f32 %v1770, %v1771
    %v1773 = vrot.slane %v1772, 2
    %v1774 = vmax.f32 %v1772, %v1773
    %v1775 = vrot.slane %v1774, 1
    %v1776 = vmax.f32 %v1774, %v1775
    %v1777 = vmax.f32 %v1720, %v1722
    %v1778 = vrot.slane %v1777, 4
    %v1779 = vmax.f32 %v1777, %v1778
    %v1780 = vrot.slane %v1779, 2
    %v1781 = vmax.f32 %v1779, %v1780
    %v1782 = vrot.slane %v1781, 1
    %v1783 = vmax.f32 %v1781, %v1782
    %v1784 = vpack.c.bf16 %v1752, %v1752
    %v1785 = vpack.c.bf16 %v1753, %v1753
    %v1786 = vpack.c.bf16 %v1754, %v1754
    %v1787 = vpack.c.bf16 %v1755, %v1755
    %v1788 = vld [vmem:[#allocation22] sm:$0xf]
    %v1789 = vld [vmem:[#allocation22 + $0x4] sm:$0xf]
    %v1790 = vld [vmem:[#allocation22 + $0x8] sm:$0xf]
    %v1791 = vld [vmem:[#allocation22 + $0xc] sm:$0xf]
    %v1792 = vld [vmem:[#allocation22 + $0x10] sm:$0xf]
    %v1793 = vld [vmem:[#allocation22 + $0x14] sm:$0xf]
    %v1794 = vld [vmem:[#allocation22 + $0x18] sm:$0xf]
    %v1795 = vld [vmem:[#allocation22 + $0x1c] sm:$0xf]
    %v1796 = vld [vmem:[#allocation22 + $0x20] sm:$0xf]
    %v1797 = vld [vmem:[#allocation22 + $0x24] sm:$0xf]
    %v1798 = vld [vmem:[#allocation22 + $0x28] sm:$0xf]
    %v1799 = vld [vmem:[#allocation22 + $0x2c] sm:$0xf]
    %v1800 = vld [vmem:[#allocation22 + $0x30] sm:$0xf]
    %v1801 = vld [vmem:[#allocation22 + $0x34] sm:$0xf]
    %v1802 = vld [vmem:[#allocation22 + $0x38] sm:$0xf]
    %v1803 = vld [vmem:[#allocation22 + $0x3c] sm:$0xf]
    %v1804 = vld [vmem:[#allocation22 + $0x40] sm:$0xf]
    %v1805 = vld [vmem:[#allocation22 + $0x44] sm:$0xf]
    %v1806 = vld [vmem:[#allocation22 + $0x48] sm:$0xf]
    %v1807 = vld [vmem:[#allocation22 + $0x4c] sm:$0xf]
    %v1808 = vld [vmem:[#allocation22 + $0x50] sm:$0xf]
    %v1809 = vld [vmem:[#allocation22 + $0x54] sm:$0xf]
    %v1810 = vld [vmem:[#allocation22 + $0x58] sm:$0xf]
    %v1811 = vld [vmem:[#allocation22 + $0x5c] sm:$0xf]
    %v1812 = vld [vmem:[#allocation22 + $0x60] sm:$0xf]
    %v1813 = vld [vmem:[#allocation22 + $0x64] sm:$0xf]
    %v1814 = vld [vmem:[#allocation22 + $0x68] sm:$0xf]
    %v1815 = vld [vmem:[#allocation22 + $0x6c] sm:$0xf]
    %v1816 = vld [vmem:[#allocation22 + $0x70] sm:$0xf]
    %v1817 = vld [vmem:[#allocation22 + $0x74] sm:$0xf]
    %v1818 = vld [vmem:[#allocation22 + $0x78] sm:$0xf]
    %v1819 = vld [vmem:[#allocation22 + $0x7c] sm:$0xf]
    %v1820 = vpack.c.bf16 %v1762, %v1762
    %v1821 = vpack.c.bf16 %v1769, %v1769
    %v1822 = vpack.c.bf16 %v1776, %v1776
    %v1823 = vpack.c.bf16 %v1783, %v1783
    %v1824 = vld [vmem:[#allocation23] sm:$0xf]
    %v1825 = vld [vmem:[#allocation23 + $0x4] sm:$0xf]
    %v1826 = vld [vmem:[#allocation23 + $0x8] sm:$0xf]
    %v1827 = vld [vmem:[#allocation23 + $0xc] sm:$0xf]
    %v1828 = vld [vmem:[#allocation23 + $0x10] sm:$0xf]
    %v1829 = vld [vmem:[#allocation23 + $0x14] sm:$0xf]
    %v1830 = vld [vmem:[#allocation23 + $0x18] sm:$0xf]
    %v1831 = vld [vmem:[#allocation23 + $0x1c] sm:$0xf]
    %v1832 = vld [vmem:[#allocation23 + $0x20] sm:$0xf]
    %v1833 = vld [vmem:[#allocation23 + $0x24] sm:$0xf]
    %v1834 = vld [vmem:[#allocation23 + $0x28] sm:$0xf]
    %v1835 = vld [vmem:[#allocation23 + $0x2c] sm:$0xf]
    %v1836 = vld [vmem:[#allocation23 + $0x30] sm:$0xf]
    %v1837 = vld [vmem:[#allocation23 + $0x34] sm:$0xf]
    %v1838 = vld [vmem:[#allocation23 + $0x38] sm:$0xf]
    %v1839 = vld [vmem:[#allocation23 + $0x3c] sm:$0xf]
    %v1840 = vld [vmem:[#allocation23 + $0x40] sm:$0xf]
    %v1841 = vld [vmem:[#allocation23 + $0x44] sm:$0xf]
    %v1842 = vld [vmem:[#allocation23 + $0x48] sm:$0xf]
    %v1843 = vld [vmem:[#allocation23 + $0x4c] sm:$0xf]
    %v1844 = vld [vmem:[#allocation23 + $0x50] sm:$0xf]
    %v1845 = vld [vmem:[#allocation23 + $0x54] sm:$0xf]
    %v1846 = vld [vmem:[#allocation23 + $0x58] sm:$0xf]
    %v1847 = vld [vmem:[#allocation23 + $0x5c] sm:$0xf]
    %v1848 = vld [vmem:[#allocation23 + $0x60] sm:$0xf]
    %v1849 = vld [vmem:[#allocation23 + $0x64] sm:$0xf]
    %v1850 = vld [vmem:[#allocation23 + $0x68] sm:$0xf]
    %v1851 = vld [vmem:[#allocation23 + $0x6c] sm:$0xf]
    %v1852 = vld [vmem:[#allocation23 + $0x70] sm:$0xf]
    %v1853 = vld [vmem:[#allocation23 + $0x74] sm:$0xf]
    %v1854 = vld [vmem:[#allocation23 + $0x78] sm:$0xf]
    %v1855 = vld [vmem:[#allocation23 + $0x7c] sm:$0xf]
    %v1860 = vunpack.c.l.b16 %v1820
    %v1861 = vunpack.c.l.b16 %v1821
    %v1862 = vunpack.c.l.b16 %v1822
    %v1863 = vunpack.c.l.b16 %v1823
    %vm1864 = vcmask 1041409
    %v1865 = vsel %vm1864, %v1862, %v1860
    %v1866 = vsel %vm1864, %v1863, %v1861
    %v1867 = vpack.c.b16 %v1865, %v1865
    %v1868 = vpack.c.b16 %v1866, %v1866
    %v1903 = vunpack.c.l.b16 %v1824
    %v1904 = vunpack.c.l.b16 %v1825
    %v1905 = vunpack.c.l.b16 %v1826
    %v1906 = vunpack.c.l.b16 %v1827
    %v1907 = vunpack.c.l.b16 %v1828
    %v1908 = vunpack.c.l.b16 %v1829
    %v1909 = vunpack.c.l.b16 %v1830
    %v1910 = vunpack.c.l.b16 %v1831
    %v1911 = vunpack.c.l.b16 %v1832
    %v1912 = vunpack.c.l.b16 %v1833
    %v1913 = vunpack.c.l.b16 %v1834
    %v1914 = vunpack.c.l.b16 %v1835
    %v1915 = vunpack.c.l.b16 %v1836
    %v1916 = vunpack.c.l.b16 %v1837
    %v1917 = vunpack.c.l.b16 %v1838
    %v1918 = vunpack.c.l.b16 %v1839
    %v1919 = vunpack.c.l.b16 %v1840
    %v1920 = vunpack.c.l.b16 %v1841
    %v1921 = vunpack.c.l.b16 %v1842
    %v1922 = vunpack.c.l.b16 %v1843
    %v1923 = vunpack.c.l.b16 %v1844
    %v1924 = vunpack.c.l.b16 %v1845
    %v1925 = vunpack.c.l.b16 %v1846
    %v1926 = vunpack.c.l.b16 %v1847
    %v1927 = vunpack.c.l.b16 %v1848
    %v1928 = vunpack.c.l.b16 %v1849
    %v1929 = vunpack.c.l.b16 %v1850
    %v1930 = vunpack.c.l.b16 %v1851
    %v1931 = vunpack.c.l.b16 %v1852
    %v1932 = vunpack.c.l.b16 %v1853
    %v1933 = vunpack.c.l.b16 %v1854
    %v1934 = vunpack.c.l.b16 %v1855
    %v1935 = vpack.c.b16 %v1904, %v1903
    %v1936 = vpack.c.b16 %v1906, %v1905
    %v1937 = vpack.c.b16 %v1908, %v1907
    %v1938 = vpack.c.b16 %v1910, %v1909
    %v1939 = vpack.c.b16 %v1912, %v1911
    %v1940 = vpack.c.b16 %v1914, %v1913
    %v1941 = vpack.c.b16 %v1916, %v1915
    %v1942 = vpack.c.b16 %v1918, %v1917
    %v1943 = vpack.c.b16 %v1920, %v1919
    %v1944 = vpack.c.b16 %v1922, %v1921
    %v1945 = vpack.c.b16 %v1924, %v1923
    %v1946 = vpack.c.b16 %v1926, %v1925
    %v1947 = vpack.c.b16 %v1928, %v1927
    %v1948 = vpack.c.b16 %v1930, %v1929
    %v1949 = vpack.c.b16 %v1932, %v1931
    %v1950 = vpack.c.b16 %v1934, %v1933
    %1967 = vmatprep.subr.bf16.mxu0 0
    %1968 = vmatpush1.bf16.msra.mxu0 %v1942
    %1969 = vmatprep.subr.bf16.mxu0 0
    %1970 = vmatpush1.bf16.msra.mxu0 %v1941
    %1971 = vmatprep.subr.bf16.mxu0 0
    %1972 = vmatpush1.bf16.msra.mxu0 %v1940
    %1973 = vmatprep.subr.bf16.mxu0 0
    %1974 = vmatpush1.bf16.msra.mxu0 %v1939
    %1975 = vmatprep.subr.bf16.mxu0 0
    %1976 = vmatpush1.bf16.msra.mxu0 %v1938
    %1977 = vmatprep.subr.bf16.mxu0 0
    %1978 = vmatpush1.bf16.msra.mxu0 %v1937
    %1979 = vmatprep.subr.bf16.mxu0 0
    %1980 = vmatpush1.bf16.msra.mxu0 %v1936
    %1981 = vmatprep.subr.bf16.mxu0 0
    %1982 = vmatpush1.bf16.msra.mxu0 %v1935
    %1983 = vmatprep.subr.bf16.mxu0 0
    %1984 = vmatpush2.bf16.msra.mxu0 %v1950
    %1985 = vmatprep.subr.bf16.mxu0 0
    %1986 = vmatpush2.bf16.msra.mxu0 %v1949
    %1987 = vmatprep.subr.bf16.mxu0 0
    %1988 = vmatpush2.bf16.msra.mxu0 %v1948
    %1989 = vmatprep.subr.bf16.mxu0 0
    %1990 = vmatpush2.bf16.msra.mxu0 %v1947
    %1991 = vmatprep.subr.bf16.mxu0 0
    %1992 = vmatpush2.bf16.msra.mxu0 %v1946
    %1993 = vmatprep.subr.bf16.mxu0 0
    %1994 = vmatpush2.bf16.msra.mxu0 %v1945
    %1995 = vmatprep.subr.bf16.mxu0 0
    %1996 = vmatpush2.bf16.msra.mxu0 %v1944
    %1997 = vmatprep.subr.bf16.mxu0 0
    %1998 = vmatpush2.bf16.msra.mxu0 %v1943
    %1999 = vmatprep.mubr.bf16.mxu0 %v1868
    %2000 = vmatmul.mubr.bf16.gmra.mxu0 %v1867
    %v2001 = vpop.f32.mrf.mxu0
    %v2002 = vadd.f32 0.0, %v2001
    %v2003 = vpop.f32.mrf.mxu0
    %v2004 = vpop.f32.mrf.mxu0
    %v2005 = vpop.f32.mrf.mxu0
    %2006 = vdwg.mxu0
    %v2011 = vunpack.c.l.b16 %v1784
    %v2012 = vunpack.c.l.b16 %v1785
    %v2013 = vunpack.c.l.b16 %v1786
    %v2014 = vunpack.c.l.b16 %v1787
    %v2015 = vsel %vm1864, %v2013, %v2011
    %v2016 = vsel %vm1864, %v2014, %v2012
    %v2017 = vpack.c.b16 %v2015, %v2015
    %v2018 = vpack.c.b16 %v2016, %v2016
    %v2053 = vunpack.c.l.b16 %v1788
    %v2054 = vunpack.c.l.b16 %v1789
    %v2055 = vunpack.c.l.b16 %v1790
    %v2056 = vunpack.c.l.b16 %v1791
    %v2057 = vunpack.c.l.b16 %v1792
    %v2058 = vunpack.c.l.b16 %v1793
    %v2059 = vunpack.c.l.b16 %v1794
    %v2060 = vunpack.c.l.b16 %v1795
    %v2061 = vunpack.c.l.b16 %v1796
    %v2062 = vunpack.c.l.b16 %v1797
    %v2063 = vunpack.c.l.b16 %v1798
    %v2064 = vunpack.c.l.b16 %v1799
    %v2065 = vunpack.c.l.b16 %v1800
    %v2066 = vunpack.c.l.b16 %v1801
    %v2067 = vunpack.c.l.b16 %v1802
    %v2068 = vunpack.c.l.b16 %v1803
    %v2069 = vunpack.c.l.b16 %v1804
    %v2070 = vunpack.c.l.b16 %v1805
    %v2071 = vunpack.c.l.b16 %v1806
    %v2072 = vunpack.c.l.b16 %v1807
    %v2073 = vunpack.c.l.b16 %v1808
    %v2074 = vunpack.c.l.b16 %v1809
    %v2075 = vunpack.c.l.b16 %v1810
    %v2076 = vunpack.c.l.b16 %v1811
    %v2077 = vunpack.c.l.b16 %v1812
    %v2078 = vunpack.c.l.b16 %v1813
    %v2079 = vunpack.c.l.b16 %v1814
    %v2080 = vunpack.c.l.b16 %v1815
    %v2081 = vunpack.c.l.b16 %v1816
    %v2082 = vunpack.c.l.b16 %v1817
    %v2083 = vunpack.c.l.b16 %v1818
    %v2084 = vunpack.c.l.b16 %v1819
    %v2085 = vpack.c.b16 %v2054, %v2053
    %v2086 = vpack.c.b16 %v2056, %v2055
    %v2087 = vpack.c.b16 %v2058, %v2057
    %v2088 = vpack.c.b16 %v2060, %v2059
    %v2089 = vpack.c.b16 %v2062, %v2061
    %v2090 = vpack.c.b16 %v2064, %v2063
    %v2091 = vpack.c.b16 %v2066, %v2065
    %v2092 = vpack.c.b16 %v2068, %v2067
    %v2093 = vpack.c.b16 %v2070, %v2069
    %v2094 = vpack.c.b16 %v2072, %v2071
    %v2095 = vpack.c.b16 %v2074, %v2073
    %v2096 = vpack.c.b16 %v2076, %v2075
    %v2097 = vpack.c.b16 %v2078, %v2077
    %v2098 = vpack.c.b16 %v2080, %v2079
    %v2099 = vpack.c.b16 %v2082, %v2081
    %v2100 = vpack.c.b16 %v2084, %v2083
    %2117 = vmatprep.subr.bf16.mxu0 0
    %2118 = vmatpush1.bf16.msra.mxu0 %v2092
    %2119 = vmatprep.subr.bf16.mxu0 0
    %2120 = vmatpush1.bf16.msra.mxu0 %v2091
    %2121 = vmatprep.subr.bf16.mxu0 0
    %2122 = vmatpush1.bf16.msra.mxu0 %v2090
    %2123 = vmatprep.subr.bf16.mxu0 0
    %2124 = vmatpush1.bf16.msra.mxu0 %v2089
    %2125 = vmatprep.subr.bf16.mxu0 0
    %2126 = vmatpush1.bf16.msra.mxu0 %v2088
    %2127 = vmatprep.subr.bf16.mxu0 0
    %2128 = vmatpush1.bf16.msra.mxu0 %v2087
    %2129 = vmatprep.subr.bf16.mxu0 0
    %2130 = vmatpush1.bf16.msra.mxu0 %v2086
    %2131 = vmatprep.subr.bf16.mxu0 0
    %2132 = vmatpush1.bf16.msra.mxu0 %v2085
    %2133 = vmatprep.subr.bf16.mxu0 0
    %2134 = vmatpush2.bf16.msra.mxu0 %v2100
    %2135 = vmatprep.subr.bf16.mxu0 0
    %2136 = vmatpush2.bf16.msra.mxu0 %v2099
    %2137 = vmatprep.subr.bf16.mxu0 0
    %2138 = vmatpush2.bf16.msra.mxu0 %v2098
    %2139 = vmatprep.subr.bf16.mxu0 0
    %2140 = vmatpush2.bf16.msra.mxu0 %v2097
    %2141 = vmatprep.subr.bf16.mxu0 0
    %2142 = vmatpush2.bf16.msra.mxu0 %v2096
    %2143 = vmatprep.subr.bf16.mxu0 0
    %2144 = vmatpush2.bf16.msra.mxu0 %v2095
    %2145 = vmatprep.subr.bf16.mxu0 0
    %2146 = vmatpush2.bf16.msra.mxu0 %v2094
    %2147 = vmatprep.subr.bf16.mxu0 0
    %2148 = vmatpush2.bf16.msra.mxu0 %v2093
    %2149 = vmatprep.mubr.bf16.mxu0 %v2018
    %2150 = vmatmul.mubr.bf16.gmra.mxu0 %v2017
    %v2151 = vpop.f32.mrf.mxu0
    %v2152 = vadd.f32 %v2002, %v2151
    %v2153 = vpop.f32.mrf.mxu0
    %v2154 = vpop.f32.mrf.mxu0
    %v2155 = vpop.f32.mrf.mxu0
    %2156 = vdwg.mxu0
    %v2157 = vld [vmem:[#allocation25] sm:$0x1]
    %v2159 = vlaneseq
    %v2160 = vshrl.u32 %v2159, 7
    %v2161 = vsub.s32 0, %v2160
    %v2162 = vrot.slane %v2157, %v2161
    %v2164 = vmul.f32 %v2152, %v2162
    %v2165 = vld [vmem:[#allocation26] sm:$0x1]
    %v2167 = vlaneseq
    %v2168 = vshrl.u32 %v2167, 7
    %v2169 = vsub.s32 0, %v2168
    %v2170 = vrot.slane %v2165, %v2169
    %v2172 = vadd.f32 %v2164, %v2170
    %v2173 = vmax.f32 %v2172, 0.0
    %v2174 = vld [vmem:[#allocation28] sm:$0x1]
    %v2176 = vlaneseq
    %v2177 = vshrl.u32 %v2176, 7
    %v2178 = vsub.s32 0, %v2177
    %v2179 = vrot.slane %v2174, %v2178
    %v2181 = vmul.f32 %v2173, %v2179
    %vm2182 = vcmask 1041408
    %v2183 = vsel %vm2182, %v2181, 0.0
    %2184 = vadd.xlane.f32.xlu0 %v2183
    %v2185 = vpop.xlane.xlu0 %2184
    %v2186 = vld [vmem:[#allocation2] sm:$0x1]
    %v2188 = vlaneseq
    %v2189 = vshrl.u32 %v2188, 7
    %v2190 = vsub.s32 0, %v2189
    %v2191 = vrot.slane %v2186, %v2190
    %v2193 = vadd.f32 %v2185, %v2191
    %vm2194 = vcmp.gt.f32.partialorder %v2193, 20.0
    %v2195 = vmin.f32 %v2193, 20.0
    %v2196 = vmul.f32 %v2195, 1.442695
    %v2197 = vpow.pop %v2196
    %v2198 = vadd.f32 %v2197, 1.0
    %v2199 = vlog2.pop %v2198
    %v2200 = vmul.f32 %v2199, 0.6931472
    %v2201 = vmul.f32 -0.5, %v2197
    %v2202 = vadd.f32 %v2201, 1.0
    %v2203 = vmul.f32 %v2202, %v2197
    %v2204 = vand.u32 2147483647, %v2197
    %vm2205 = vcmp.lt.f32.partialorder %v2204, 0.0004427343
    %v2206 = vsel %vm2205, %v2203, %v2200
    %v2207 = vsel %vm2194, %v2193, %v2206
    %vm2208 = vcmask 1024
    %2209 = vst.msk [vmem:[%s25] sm:$0x3] %vm2208, %v2207
    // Predicated region
    $region170: #{custom_cnn_forward.1} parent=1 // pred_check
      _
    $region171: #{custom_cnn_forward.1} parent=1 // pred_check_branch
      %2211 = sbr.rel (0) target = $region173
    $region172: #{custom_cnn_forward.1} parent=1 // pred_region
      _
    $region173: #{custom_cnn_forward.1} parent=1 // pred_fallthru
      _
    // Predicated region
    $region174: #{custom_cnn_forward.1} parent=1 // pred_check
      _
    $region175: #{custom_cnn_forward.1} parent=1 // pred_check_branch
      %2213 = sbr.rel (0) target = $region177
    $region176: #{custom_cnn_forward.1} parent=1 // pred_region
      _
    $region177: #{custom_cnn_forward.1} parent=1 // pred_fallthru
      _
    %2214 = vsyncpa [#allocation4], 1
    %2215 = vsyncpa [#allocation6], 1
    %2216 = vsyncpa [#allocation9], 1
    %2217 = vsyncpa [#allocation12], 1
    %2218 = vsyncpa [#allocation15], 1
    %2219 = vsyncpa [#allocation18], 1
    %2220 = vsyncpa [#allocation21], 1
    %2221 = vsyncpa [#allocation24], 1
    %2222 = vsyncpa [#allocation27], 1

</llo_original>
